<compile_context>
chip_gen: v5e
topology: v5e:2x2
jax: 0.10.0
libtpu: 0.0.40
codegen_flags: <defaults>
</compile_context>

<pallas_src>
import functools

import jax
import jax.numpy as jnp
import numpy as np
from jax.experimental import pallas as pl
from jax.experimental.pallas import tpu as pltpu


# ----------------------------------------------------------------------------- kernel ---

def _decoder_group_kernel(*args, res_normalize, block_meta):
    """args = x_ref, <per-block weight refs...>, out_ref, pad_a, pad_b.

    block_meta: tuple of has_eq flags (static).  Per block the weight refs are
      ([meq, beq] if has_eq) + [m1, b1, bw2, b2, bw3, b3, bw4, b4].
    """
    x_ref = args[0]
    out_ref, pad_a, pad_b = args[-3], args[-2], args[-1]
    w_refs = list(args[1:-3])

    H = x_ref.shape[0]                       # block is one batch element: (H, W*Cin)
    cdt = pad_a.dtype
    zero_row = jnp.zeros((1, pad_a.shape[1]), cdt)

    # Zero ONLY the two padding rows of each scratch, once per grid step.  The interior
    # rows are fully overwritten before every use and the pad rows are never written.
    pad_a[0:1, :] = zero_row
    pad_a[H + 1:H + 2, :] = zero_row
    pad_b[0:1, :] = zero_row
    pad_b[H + 1:H + 2, :] = zero_row

    def mm(a, b):
        return jnp.dot(a, b, preferred_element_type=jnp.float32)

    def conv3x3(pad_ref, bw_ref, brow_ref):
        # pad_ref rows: [0] = top zero pad, [1..H] = activation rows, [H+1] = bottom pad.
        # Each kernel row dy is a contiguous sublane-shifted slice; dx lives in the band
        # structure of bw_ref[dy] (shape (W*cin, W*cout)).
        acc = mm(pad_ref[0:H, :], bw_ref[0])
        acc = acc + mm(pad_ref[1:H + 1, :], bw_ref[1])
        acc = acc + mm(pad_ref[2:H + 2, :], bw_ref[2])
        return acc + brow_ref[...]           # bias read/broadcast once per conv

    x = x_ref[...].astype(jnp.float32)       # (H, W*Cin) current activation, f32
    idx = 0
    for has_eq in block_meta:                # static Python loop, traced once
        if has_eq:
            meq_ref, beq_ref = w_refs[idx], w_refs[idx + 1]
            idx += 2
        (m1_ref, b1_ref, bw2_ref, b2_ref,
         bw3_ref, b3_ref, bw4_ref, b4_ref) = w_refs[idx:idx + 8]
        idx += 8

        xc = x.astype(cdt)                   # MXU operand dtype (bf16 fast path)

        # conv1x1 (Cin -> hid) via block-diagonal weight, then ReLU (f32 accumulation).
        h1 = jnp.maximum(mm(xc, m1_ref[...]) + b1_ref[...], 0.0)

        pad_a[1:H + 1, :] = h1.astype(cdt)
        h2 = jnp.maximum(conv3x3(pad_a, bw2_ref, b2_ref), 0.0)

        pad_b[1:H + 1, :] = h2.astype(cdt)
        h3 = jnp.maximum(conv3x3(pad_b, bw3_ref, b3_ref), 0.0)

        pad_a[1:H + 1, :] = h3.astype(cdt)   # reuse pad_a (its borders are still zero)
        r = jnp.maximum(conv3x3(pad_a, bw4_ref, b4_ref), 0.0)   # (H, W*Cout), f32

        if has_eq:
            eq = mm(xc, meq_ref[...]) + beq_ref[...]            # real 1x1 ch_equalizer
        else:
            eq = x                                              # nn.Identity (Cin==Cout)
        x = eq + res_normalize * r           # f32 activation fed to the next block

    out_ref[...] = x.astype(out_ref.dtype)


# ------------------------------------------------------------------- weight preparation ---

def _band_selector(W):
    """S[dx, wp, w] = 1 iff input column wp feeds output column w through kernel tap dx."""
    S = np.zeros((3, W, W), np.float32)
    for w in range(W):
        for dx in range(3):
            wp = w + dx - 1
            if 0 <= wp < W:                  # width zero-padding is implicit (no entry)
                S[dx, wp, w] = 1.0
    return S


def _prep_block_params(p, W, compute_dtype):
    """Fold the W axis into the weights:
       1x1 conv  -> block-diagonal (W*Cin, W*Cout),
       3x3 conv  -> 3 banded (W*Cin, W*Cout) matrices (one per kernel row dy),
       biases    -> lane-tiled (1, W*C) rows (kept f32)."""
    S = _band_selector(W)
    eyeW = np.eye(W, dtype=np.float32)

    def blockdiag(w):                        # (cin, cout) -> (W*cin, W*cout)
        cin, cout = w.shape
        return jnp.einsum('io,pw->piwo', w, eyeW).reshape(W * cin, W * cout)

    def banded(w):                           # (3, 3, cin, cout) -> (3, W*cin, W*cout)
        cin, cout = w.shape[2], w.shape[3]
        return jnp.einsum('dpw,kdio->kpiwo', S, w).reshape(3, W * cin, W * cout)

    def rowbias(b):                          # (c,) -> (1, W*c)
        return jnp.tile(b, W).reshape(1, -1).astype(jnp.float32)

    cd = compute_dtype
    prep = dict(
        has_eq=p['weq'] is not None,
        hid=p['w1'].shape[1],
        cout=p['w4'].shape[3],
        W=W,
        m1=blockdiag(p['w1']).astype(cd), b1=rowbias(p['b1']),
        bw2=banded(p['w2']).astype(cd), b2=rowbias(p['b2']),
        bw3=banded(p['w3']).astype(cd), b3=rowbias(p['b3']),
        bw4=banded(p['w4']).astype(cd), b4=rowbias(p['b4']),
    )
    if prep['has_eq']:
        prep['meq'] = blockdiag(p['weq']).astype(cd)
        prep['beq'] = rowbias(p['beq'])
    return prep


# --------------------------------------------------------------------------- wrapper ---

def decoder_group_forward(x_nchw, block_params, *, num_layers_per_block=4,
                          compute_dtype=jnp.bfloat16):
    """Pallas implementation of DecoderGroup.forward. x_nchw: (N, C, H, W)."""
    res_normalize = 1.0 / num_layers_per_block ** 2
    N, C, H, W = x_nchw.shape
    x = jnp.transpose(x_nchw, (0, 2, 3, 1)).reshape(N, H, W * C)   # lane-dense row layout
    x = x.astype(compute_dtype)

    preps = [_prep_block_params(p, W, compute_dtype) for p in block_params]
    hids = {pr['hid'] for pr in preps}
    assert len(hids) == 1, "all DecoderBlocks in a DecoderGroup share hidden_dim"
    hid = hids.pop()
    cout = preps[-1]['cout']

    weights, block_meta = [], []
    for pr in preps:
        block_meta.append(pr['has_eq'])
        if pr['has_eq']:
            weights += [pr['meq'], pr['beq']]
        weights += [pr['m1'], pr['b1'], pr['bw2'], pr['b2'],
                    pr['bw3'], pr['b3'], pr['bw4'], pr['b4']]

    def const_spec(a):                       # whole (small) weight, fetched once
        zeros = (0,) * a.ndim
        return pl.BlockSpec(a.shape, lambda n, z=zeros: z)

    kernel = functools.partial(
        _decoder_group_kernel,
        res_normalize=float(res_normalize),
        block_meta=tuple(block_meta))

    out = pl.pallas_call(
        kernel,
        out_shape=jax.ShapeDtypeStruct((N, H, W * cout), compute_dtype),
        grid=(N,),
        in_specs=[pl.BlockSpec((None, H, W * C), lambda n: (n, 0, 0))]
                 + [const_spec(a) for a in weights],
        out_specs=pl.BlockSpec((None, H, W * cout), lambda n: (n, 0, 0)),
        scratch_shapes=[pltpu.VMEM((H + 2, W * hid), compute_dtype),   # row-padded h1/h3
                        pltpu.VMEM((H + 2, W * hid), compute_dtype)],  # row-padded h2
        compiler_params=pltpu.CompilerParams(
            dimension_semantics=("parallel",)),
    )(x, *weights)

    out = out.reshape(N, H, W, cout).astype(jnp.float32)
    return jnp.transpose(out, (0, 3, 1, 2))                        # back to NCHW


# -------------------------------------------------------------- params & JAX reference ---

def init_decoder_block_params(key, in_channels, out_channels):
    """Deterministic synthetic DecoderBlock parameters (3x3 weights in HWIO)."""
    hid = out_channels // 4
    ks = jax.random.split(key, 10)

    def u(k, shape, fan_in):
        bound = 1.0 / float(np.sqrt(fan_in))
        return jax.random.uniform(k, shape, jnp.float32, -bound, bound)

    if in_channels == out_channels:
        weq, beq = None, None                                      # nn.Identity
    else:
        weq = u(ks[0], (in_channels, out_channels), in_channels)   # 1x1 conv
        beq = u(ks[1], (out_channels,), in_channels)
    return dict(
        weq=weq, beq=beq,
        w1=u(ks[2], (in_channels, hid), in_channels),              # 1x1 conv
        b1=u(ks[3], (hid,), in_channels),
        w2=u(ks[4], (3, 3, hid, hid), 9 * hid),
        b2=u(ks[5], (hid,), 9 * hid),
        w3=u(ks[6], (3, 3, hid, hid), 9 * hid),
        b3=u(ks[7], (hid,), 9 * hid),
        w4=u(ks[8], (3, 3, hid, out_channels), 9 * hid),
        b4=u(ks[9], (out_channels,), 9 * hid),
    )


def _reference_block(x, p, *, res_normalize):
    dn = ('NHWC', 'HWIO', 'NHWC')

    def conv(h, w, b, pad):
        y = jax.lax.conv_general_dilated(h, w, (1, 1), pad, dimension_numbers=dn)
        return y + b.reshape(1, 1, 1, -1)

    if p['weq'] is None:
        eq = x
    else:
        eq = conv(x, p['weq'].reshape(1, 1, *p['weq'].shape), p['beq'], 'VALID')
    h = jax.nn.relu(conv(x, p['w1'].reshape(1, 1, *p['w1'].shape), p['b1'], 'VALID'))
    h = jax.nn.relu(conv(h, p['w2'], p['b2'], 'SAME'))
    h = jax.nn.relu(conv(h, p['w3'], p['b3'], 'SAME'))
    r = jax.nn.relu(conv(h, p['w4'], p['b4'], 'SAME'))
    return eq + res_normalize * r


def reference_group_forward(x_nchw, block_params, *, num_layers_per_block=4):
    rn = 1.0 / num_layers_per_block ** 2
    x = jnp.transpose(x_nchw, (0, 2, 3, 1)).astype(jnp.float32)
    for p in block_params:
        x = _reference_block(x, p, res_normalize=rn)
    return jnp.transpose(x, (0, 3, 1, 2))


# -------------------------------------------------------------------------------- main ---

if __name__ == "__main__":
    key = jax.random.PRNGKey(0)
    kx, kb0, kb1 = jax.random.split(key, 3)

    # DecoderGroup(multiplier=2, size=8, num_blocks=2, num_layers_per_block=4, n_init=4):
    #   block 0: in = n_init = 4     -> out = multiplier*size = 16  (real 1x1 ch_equalizer)
    #   block 1: in = 16             -> out = 16                    (ch_equalizer = Identity)
    multiplier, size, n_init, num_layers_per_block = 2, 8, 4, 4
    c_out = multiplier * size
    N, H, W = 2, 16, 16

    blocks = [init_decoder_block_params(kb0, n_init, c_out),
              init_decoder_block_params(kb1, c_out, c_out)]
    x = jax.random.normal(kx, (N, n_init, H, W), jnp.float32)

    ref = reference_group_forward(x, blocks, num_layers_per_block=num_layers_per_block)

    # f32 mode: tight check of the restructured (banded / block-diagonal) conv math.
    out_f32 = jax.block_until_ready(decoder_group_forward(
        x, blocks, num_layers_per_block=num_layers_per_block, compute_dtype=jnp.float32))
    assert out_f32.shape == (N, c_out, H, W), out_f32.shape
    np.testing.assert_allclose(np.asarray(out_f32), np.asarray(ref), rtol=1e-4, atol=1e-4)

    # bf16 mode (default fast path): MXU-native operands, f32 accumulation.
    out_bf16 = jax.block_until_ready(decoder_group_forward(
        x, blocks, num_layers_per_block=num_layers_per_block, compute_dtype=jnp.bfloat16))
    assert out_bf16.shape == (N, c_out, H, W), out_bf16.shape
    np.testing.assert_allclose(np.asarray(out_bf16), np.asarray(ref), rtol=5e-2, atol=5e-2)

    print("KERNEL_OK")
</pallas_src>

<mosaic_0001>
module attributes {stable_mosaic.version = 11 : i64} {
  func.func @_decoder_group_kernel(%arg0: i32, %arg1: memref<1x16x64xf32, #tpu.memory_space<vmem>>, %arg2: memref<64x256xf32, #tpu.memory_space<vmem>>, %arg3: memref<1x256xf32, #tpu.memory_space<vmem>>, %arg4: memref<64x64xf32, #tpu.memory_space<vmem>>, %arg5: memref<1x64xf32, #tpu.memory_space<vmem>>, %arg6: memref<3x64x64xf32, #tpu.memory_space<vmem>>, %arg7: memref<1x64xf32, #tpu.memory_space<vmem>>, %arg8: memref<3x64x64xf32, #tpu.memory_space<vmem>>, %arg9: memref<1x64xf32, #tpu.memory_space<vmem>>, %arg10: memref<3x64x256xf32, #tpu.memory_space<vmem>>, %arg11: memref<1x256xf32, #tpu.memory_space<vmem>>, %arg12: memref<256x64xf32, #tpu.memory_space<vmem>>, %arg13: memref<1x64xf32, #tpu.memory_space<vmem>>, %arg14: memref<3x64x64xf32, #tpu.memory_space<vmem>>, %arg15: memref<1x64xf32, #tpu.memory_space<vmem>>, %arg16: memref<3x64x64xf32, #tpu.memory_space<vmem>>, %arg17: memref<1x64xf32, #tpu.memory_space<vmem>>, %arg18: memref<3x64x256xf32, #tpu.memory_space<vmem>>, %arg19: memref<1x256xf32, #tpu.memory_space<vmem>>, %arg20: memref<1x16x256xf32, #tpu.memory_space<vmem>>, %arg21: memref<18x64xf32, #tpu.memory_space<vmem>>, %arg22: memref<18x64xf32, #tpu.memory_space<vmem>>) attributes {dimension_semantics = [#tpu.dimension_semantics<parallel>], iteration_bounds = array<i64: 2>, scalar_prefetch = 0 : i64, scratch_operands = 2 : i64, tpu.core_type = #tpu.core_type<tc>, window_params = [{transform_indices = @transform_0, window_bounds = array<i64: 1, 16, 64>}, {pipeline_mode = #tpu.pipeline_mode<synchronous>, transform_indices = @transform_1, window_bounds = array<i64: 64, 256>}, {pipeline_mode = #tpu.pipeline_mode<synchronous>, transform_indices = @transform_2, window_bounds = array<i64: 1, 256>}, {pipeline_mode = #tpu.pipeline_mode<synchronous>, transform_indices = @transform_3, window_bounds = array<i64: 64, 64>}, {pipeline_mode = #tpu.pipeline_mode<synchronous>, transform_indices = @transform_4, window_bounds = array<i64: 1, 64>}, {pipeline_mode = #tpu.pipeline_mode<synchronous>, transform_indices = @transform_5, window_bounds = array<i64: 3, 64, 64>}, {pipeline_mode = #tpu.pipeline_mode<synchronous>, transform_indices = @transform_6, window_bounds = array<i64: 1, 64>}, {pipeline_mode = #tpu.pipeline_mode<synchronous>, transform_indices = @transform_7, window_bounds = array<i64: 3, 64, 64>}, {pipeline_mode = #tpu.pipeline_mode<synchronous>, transform_indices = @transform_8, window_bounds = array<i64: 1, 64>}, {pipeline_mode = #tpu.pipeline_mode<synchronous>, transform_indices = @transform_9, window_bounds = array<i64: 3, 64, 256>}, {pipeline_mode = #tpu.pipeline_mode<synchronous>, transform_indices = @transform_10, window_bounds = array<i64: 1, 256>}, {pipeline_mode = #tpu.pipeline_mode<synchronous>, transform_indices = @transform_11, window_bounds = array<i64: 256, 64>}, {pipeline_mode = #tpu.pipeline_mode<synchronous>, transform_indices = @transform_12, window_bounds = array<i64: 1, 64>}, {pipeline_mode = #tpu.pipeline_mode<synchronous>, transform_indices = @transform_13, window_bounds = array<i64: 3, 64, 64>}, {pipeline_mode = #tpu.pipeline_mode<synchronous>, transform_indices = @transform_14, window_bounds = array<i64: 1, 64>}, {pipeline_mode = #tpu.pipeline_mode<synchronous>, transform_indices = @transform_15, window_bounds = array<i64: 3, 64, 64>}, {pipeline_mode = #tpu.pipeline_mode<synchronous>, transform_indices = @transform_16, window_bounds = array<i64: 1, 64>}, {pipeline_mode = #tpu.pipeline_mode<synchronous>, transform_indices = @transform_17, window_bounds = array<i64: 3, 64, 256>}, {pipeline_mode = #tpu.pipeline_mode<synchronous>, transform_indices = @transform_18, window_bounds = array<i64: 1, 256>}, {transform_indices = @transform_19, window_bounds = array<i64: 1, 16, 256>}]} {
    %cst = arith.constant 0.000000e+00 : f32
    %0 = vector.broadcast %cst : f32 to vector<1x64xf32>
    %c0 = arith.constant 0 : index
    %c0_0 = arith.constant 0 : index
    %1 = vector.load %arg21[%c0, %c0_0] : memref<18x64xf32, #tpu.memory_space<vmem>>, vector<1x64xf32>
    tpu.vector_store %arg21[%c0, %c0_0], %0 {strides = array<i32>} : memref<18x64xf32, #tpu.memory_space<vmem>>, vector<1x64xf32>,
    %c17 = arith.constant 17 : index
    %c0_1 = arith.constant 0 : index
    %2 = vector.load %arg21[%c17, %c0_1] : memref<18x64xf32, #tpu.memory_space<vmem>>, vector<1x64xf32>
    tpu.vector_store %arg21[%c17, %c0_1], %0 {strides = array<i32>} : memref<18x64xf32, #tpu.memory_space<vmem>>, vector<1x64xf32>,
    %c0_2 = arith.constant 0 : index
    %c0_3 = arith.constant 0 : index
    %3 = vector.load %arg22[%c0_2, %c0_3] : memref<18x64xf32, #tpu.memory_space<vmem>>, vector<1x64xf32>
    tpu.vector_store %arg22[%c0_2, %c0_3], %0 {strides = array<i32>} : memref<18x64xf32, #tpu.memory_space<vmem>>, vector<1x64xf32>,
    %c17_4 = arith.constant 17 : index
    %c0_5 = arith.constant 0 : index
    %4 = vector.load %arg22[%c17_4, %c0_5] : memref<18x64xf32, #tpu.memory_space<vmem>>, vector<1x64xf32>
    tpu.vector_store %arg22[%c17_4, %c0_5], %0 {strides = array<i32>} : memref<18x64xf32, #tpu.memory_space<vmem>>, vector<1x64xf32>,
    %c0_6 = arith.constant 0 : index
    %c0_7 = arith.constant 0 : index
    %c0_8 = arith.constant 0 : index
    %5 = vector.load %arg1[%c0_6, %c0_7, %c0_8] : memref<1x16x64xf32, #tpu.memory_space<vmem>>, vector<1x16x64xf32>
    %6 = vector.shape_cast %5 : vector<1x16x64xf32> to vector<16x64xf32>
    %c0_9 = arith.constant 0 : index
    %c0_10 = arith.constant 0 : index
    %7 = vector.load %arg4[%c0_9, %c0_10] : memref<64x64xf32, #tpu.memory_space<vmem>>, vector<64x64xf32>
    %cst_11 = arith.constant dense<0.000000e+00> : vector<16x64xf32>
    %8 = tpu.matmul %6, %7, %cst_11 {dimension_numbers = #tpu.dot_dimension_numbers<[1], [0], [0], [1], [0, 0, 1, 1], [], []>} : vector<16x64xf32>, vector<64x64xf32>, vector<16x64xf32> -> vector<16x64xf32>
    %c0_12 = arith.constant 0 : index
    %c0_13 = arith.constant 0 : index
    %9 = vector.load %arg5[%c0_12, %c0_13] : memref<1x64xf32, #tpu.memory_space<vmem>>, vector<1x64xf32>
    %10 = vector.broadcast %9 : vector<1x64xf32> to vector<16x64xf32>
    %11 = arith.addf %8, %10 : vector<16x64xf32>
    %cst_14 = arith.constant 0.000000e+00 : f32
    %12 = vector.broadcast %cst_14 : f32 to vector<16x64xf32>
    %13 = arith.maximumf %11, %12 : vector<16x64xf32>
    %c1 = arith.constant 1 : index
    %c0_15 = arith.constant 0 : index
    %14 = vector.load %arg21[%c1, %c0_15] : memref<18x64xf32, #tpu.memory_space<vmem>>, vector<16x64xf32>
    tpu.vector_store %arg21[%c1, %c0_15], %13 {strides = array<i32>} : memref<18x64xf32, #tpu.memory_space<vmem>>, vector<16x64xf32>,
    %c0_16 = arith.constant 0 : index
    %c0_17 = arith.constant 0 : index
    %15 = vector.load %arg21[%c0_16, %c0_17] : memref<18x64xf32, #tpu.memory_space<vmem>>, vector<16x64xf32>
    %c0_18 = arith.constant 0 : index
    %c0_19 = arith.constant 0 : index
    %c0_20 = arith.constant 0 : index
    %16 = vector.load %arg6[%c0_18, %c0_19, %c0_20] : memref<3x64x64xf32, #tpu.memory_space<vmem>>, vector<1x64x64xf32>
    %17 = vector.shape_cast %16 : vector<1x64x64xf32> to vector<64x64xf32>
    %cst_21 = arith.constant dense<0.000000e+00> : vector<16x64xf32>
    %18 = tpu.matmul %15, %17, %cst_21 {dimension_numbers = #tpu.dot_dimension_numbers<[1], [0], [0], [1], [0, 0, 1, 1], [], []>} : vector<16x64xf32>, vector<64x64xf32>, vector<16x64xf32> -> vector<16x64xf32>
    %c1_22 = arith.constant 1 : index
    %c0_23 = arith.constant 0 : index
    %19 = vector.load %arg21[%c1_22, %c0_23] : memref<18x64xf32, #tpu.memory_space<vmem>>, vector<16x64xf32>
    %c1_24 = arith.constant 1 : index
    %c0_25 = arith.constant 0 : index
    %c0_26 = arith.constant 0 : index
    %20 = vector.load %arg6[%c1_24, %c0_25, %c0_26] : memref<3x64x64xf32, #tpu.memory_space<vmem>>, vector<1x64x64xf32>
    %21 = vector.shape_cast %20 : vector<1x64x64xf32> to vector<64x64xf32>
    %cst_27 = arith.constant dense<0.000000e+00> : vector<16x64xf32>
    %22 = tpu.matmul %19, %21, %cst_27 {dimension_numbers = #tpu.dot_dimension_numbers<[1], [0], [0], [1], [0, 0, 1, 1], [], []>} : vector<16x64xf32>, vector<64x64xf32>, vector<16x64xf32> -> vector<16x64xf32>
    %23 = arith.addf %18, %22 : vector<16x64xf32>
    %c2 = arith.constant 2 : index
    %c0_28 = arith.constant 0 : index
    %24 = vector.load %arg21[%c2, %c0_28] : memref<18x64xf32, #tpu.memory_space<vmem>>, vector<16x64xf32>
    %c2_29 = arith.constant 2 : index
    %c0_30 = arith.constant 0 : index
    %c0_31 = arith.constant 0 : index
    %25 = vector.load %arg6[%c2_29, %c0_30, %c0_31] : memref<3x64x64xf32, #tpu.memory_space<vmem>>, vector<1x64x64xf32>
    %26 = vector.shape_cast %25 : vector<1x64x64xf32> to vector<64x64xf32>
    %cst_32 = arith.constant dense<0.000000e+00> : vector<16x64xf32>
    %27 = tpu.matmul %24, %26, %cst_32 {dimension_numbers = #tpu.dot_dimension_numbers<[1], [0], [0], [1], [0, 0, 1, 1], [], []>} : vector<16x64xf32>, vector<64x64xf32>, vector<16x64xf32> -> vector<16x64xf32>
    %28 = arith.addf %23, %27 : vector<16x64xf32>
    %c0_33 = arith.constant 0 : index
    %c0_34 = arith.constant 0 : index
    %29 = vector.load %arg7[%c0_33, %c0_34] : memref<1x64xf32, #tpu.memory_space<vmem>>, vector<1x64xf32>
    %30 = vector.broadcast %29 : vector<1x64xf32> to vector<16x64xf32>
    %31 = arith.addf %28, %30 : vector<16x64xf32>
    %cst_35 = arith.constant 0.000000e+00 : f32
    %32 = vector.broadcast %cst_35 : f32 to vector<16x64xf32>
    %33 = arith.maximumf %31, %32 : vector<16x64xf32>
    %c1_36 = arith.constant 1 : index
    %c0_37 = arith.constant 0 : index
    %34 = vector.load %arg22[%c1_36, %c0_37] : memref<18x64xf32, #tpu.memory_space<vmem>>, vector<16x64xf32>
    tpu.vector_store %arg22[%c1_36, %c0_37], %33 {strides = array<i32>} : memref<18x64xf32, #tpu.memory_space<vmem>>, vector<16x64xf32>,
    %c0_38 = arith.constant 0 : index
    %c0_39 = arith.constant 0 : index
    %35 = vector.load %arg22[%c0_38, %c0_39] : memref<18x64xf32, #tpu.memory_space<vmem>>, vector<16x64xf32>
    %c0_40 = arith.constant 0 : index
    %c0_41 = arith.constant 0 : index
    %c0_42 = arith.constant 0 : index
    %36 = vector.load %arg8[%c0_40, %c0_41, %c0_42] : memref<3x64x64xf32, #tpu.memory_space<vmem>>, vector<1x64x64xf32>
    %37 = vector.shape_cast %36 : vector<1x64x64xf32> to vector<64x64xf32>
    %cst_43 = arith.constant dense<0.000000e+00> : vector<16x64xf32>
    %38 = tpu.matmul %35, %37, %cst_43 {dimension_numbers = #tpu.dot_dimension_numbers<[1], [0], [0], [1], [0, 0, 1, 1], [], []>} : vector<16x64xf32>, vector<64x64xf32>, vector<16x64xf32> -> vector<16x64xf32>
    %c1_44 = arith.constant 1 : index
    %c0_45 = arith.constant 0 : index
    %39 = vector.load %arg22[%c1_44, %c0_45] : memref<18x64xf32, #tpu.memory_space<vmem>>, vector<16x64xf32>
    %c1_46 = arith.constant 1 : index
    %c0_47 = arith.constant 0 : index
    %c0_48 = arith.constant 0 : index
    %40 = vector.load %arg8[%c1_46, %c0_47, %c0_48] : memref<3x64x64xf32, #tpu.memory_space<vmem>>, vector<1x64x64xf32>
    %41 = vector.shape_cast %40 : vector<1x64x64xf32> to vector<64x64xf32>
    %cst_49 = arith.constant dense<0.000000e+00> : vector<16x64xf32>
    %42 = tpu.matmul %39, %41, %cst_49 {dimension_numbers = #tpu.dot_dimension_numbers<[1], [0], [0], [1], [0, 0, 1, 1], [], []>} : vector<16x64xf32>, vector<64x64xf32>, vector<16x64xf32> -> vector<16x64xf32>
    %43 = arith.addf %38, %42 : vector<16x64xf32>
    %c2_50 = arith.constant 2 : index
    %c0_51 = arith.constant 0 : index
    %44 = vector.load %arg22[%c2_50, %c0_51] : memref<18x64xf32, #tpu.memory_space<vmem>>, vector<16x64xf32>
    %c2_52 = arith.constant 2 : index
    %c0_53 = arith.constant 0 : index
    %c0_54 = arith.constant 0 : index
    %45 = vector.load %arg8[%c2_52, %c0_53, %c0_54] : memref<3x64x64xf32, #tpu.memory_space<vmem>>, vector<1x64x64xf32>
    %46 = vector.shape_cast %45 : vector<1x64x64xf32> to vector<64x64xf32>
    %cst_55 = arith.constant dense<0.000000e+00> : vector<16x64xf32>
    %47 = tpu.matmul %44, %46, %cst_55 {dimension_numbers = #tpu.dot_dimension_numbers<[1], [0], [0], [1], [0, 0, 1, 1], [], []>} : vector<16x64xf32>, vector<64x64xf32>, vector<16x64xf32> -> vector<16x64xf32>
    %48 = arith.addf %43, %47 : vector<16x64xf32>
    %c0_56 = arith.constant 0 : index
    %c0_57 = arith.constant 0 : index
    %49 = vector.load %arg9[%c0_56, %c0_57] : memref<1x64xf32, #tpu.memory_space<vmem>>, vector<1x64xf32>
    %50 = vector.broadcast %49 : vector<1x64xf32> to vector<16x64xf32>
    %51 = arith.addf %48, %50 : vector<16x64xf32>
    %cst_58 = arith.constant 0.000000e+00 : f32
    %52 = vector.broadcast %cst_58 : f32 to vector<16x64xf32>
    %53 = arith.maximumf %51, %52 : vector<16x64xf32>
    %c1_59 = arith.constant 1 : index
    %c0_60 = arith.constant 0 : index
    %54 = vector.load %arg21[%c1_59, %c0_60] : memref<18x64xf32, #tpu.memory_space<vmem>>, vector<16x64xf32>
    tpu.vector_store %arg21[%c1_59, %c0_60], %53 {strides = array<i32>} : memref<18x64xf32, #tpu.memory_space<vmem>>, vector<16x64xf32>,
    %c0_61 = arith.constant 0 : index
    %c0_62 = arith.constant 0 : index
    %55 = vector.load %arg21[%c0_61, %c0_62] : memref<18x64xf32, #tpu.memory_space<vmem>>, vector<16x64xf32>
    %c0_63 = arith.constant 0 : index
    %c0_64 = arith.constant 0 : index
    %c0_65 = arith.constant 0 : index
    %56 = vector.load %arg10[%c0_63, %c0_64, %c0_65] : memref<3x64x256xf32, #tpu.memory_space<vmem>>, vector<1x64x256xf32>
    %57 = vector.shape_cast %56 : vector<1x64x256xf32> to vector<64x256xf32>
    %cst_66 = arith.constant dense<0.000000e+00> : vector<16x256xf32>
    %58 = tpu.matmul %55, %57, %cst_66 {dimension_numbers = #tpu.dot_dimension_numbers<[1], [0], [0], [1], [0, 0, 1, 1], [], []>} : vector<16x64xf32>, vector<64x256xf32>, vector<16x256xf32> -> vector<16x256xf32>
    %c1_67 = arith.constant 1 : index
    %c0_68 = arith.constant 0 : index
    %59 = vector.load %arg21[%c1_67, %c0_68] : memref<18x64xf32, #tpu.memory_space<vmem>>, vector<16x64xf32>
    %c1_69 = arith.constant 1 : index
    %c0_70 = arith.constant 0 : index
    %c0_71 = arith.constant 0 : index
    %60 = vector.load %arg10[%c1_69, %c0_70, %c0_71] : memref<3x64x256xf32, #tpu.memory_space<vmem>>, vector<1x64x256xf32>
    %61 = vector.shape_cast %60 : vector<1x64x256xf32> to vector<64x256xf32>
    %cst_72 = arith.constant dense<0.000000e+00> : vector<16x256xf32>
    %62 = tpu.matmul %59, %61, %cst_72 {dimension_numbers = #tpu.dot_dimension_numbers<[1], [0], [0], [1], [0, 0, 1, 1], [], []>} : vector<16x64xf32>, vector<64x256xf32>, vector<16x256xf32> -> vector<16x256xf32>
    %63 = arith.addf %58, %62 : vector<16x256xf32>
    %c2_73 = arith.constant 2 : index
    %c0_74 = arith.constant 0 : index
    %64 = vector.load %arg21[%c2_73, %c0_74] : memref<18x64xf32, #tpu.memory_space<vmem>>, vector<16x64xf32>
    %c2_75 = arith.constant 2 : index
    %c0_76 = arith.constant 0 : index
    %c0_77 = arith.constant 0 : index
    %65 = vector.load %arg10[%c2_75, %c0_76, %c0_77] : memref<3x64x256xf32, #tpu.memory_space<vmem>>, vector<1x64x256xf32>
    %66 = vector.shape_cast %65 : vector<1x64x256xf32> to vector<64x256xf32>
    %cst_78 = arith.constant dense<0.000000e+00> : vector<16x256xf32>
    %67 = tpu.matmul %64, %66, %cst_78 {dimension_numbers = #tpu.dot_dimension_numbers<[1], [0], [0], [1], [0, 0, 1, 1], [], []>} : vector<16x64xf32>, vector<64x256xf32>, vector<16x256xf32> -> vector<16x256xf32>
    %68 = arith.addf %63, %67 : vector<16x256xf32>
    %c0_79 = arith.constant 0 : index
    %c0_80 = arith.constant 0 : index
    %69 = vector.load %arg11[%c0_79, %c0_80] : memref<1x256xf32, #tpu.memory_space<vmem>>, vector<1x256xf32>
    %70 = vector.broadcast %69 : vector<1x256xf32> to vector<16x256xf32>
    %71 = arith.addf %68, %70 : vector<16x256xf32>
    %cst_81 = arith.constant 0.000000e+00 : f32
    %72 = vector.broadcast %cst_81 : f32 to vector<16x256xf32>
    %73 = arith.maximumf %71, %72 : vector<16x256xf32>
    %c0_82 = arith.constant 0 : index
    %c0_83 = arith.constant 0 : index
    %74 = vector.load %arg2[%c0_82, %c0_83] : memref<64x256xf32, #tpu.memory_space<vmem>>, vector<64x256xf32>
    %cst_84 = arith.constant dense<0.000000e+00> : vector<16x256xf32>
    %75 = tpu.matmul %6, %74, %cst_84 {dimension_numbers = #tpu.dot_dimension_numbers<[1], [0], [0], [1], [0, 0, 1, 1], [], []>} : vector<16x64xf32>, vector<64x256xf32>, vector<16x256xf32> -> vector<16x256xf32>
    %c0_85 = arith.constant 0 : index
    %c0_86 = arith.constant 0 : index
    %76 = vector.load %arg3[%c0_85, %c0_86] : memref<1x256xf32, #tpu.memory_space<vmem>>, vector<1x256xf32>
    %77 = vector.broadcast %76 : vector<1x256xf32> to vector<16x256xf32>
    %78 = arith.addf %75, %77 : vector<16x256xf32>
    %cst_87 = arith.constant 6.250000e-02 : f32
    %79 = vector.broadcast %cst_87 : f32 to vector<16x256xf32>
    %80 = arith.mulf %79, %73 : vector<16x256xf32>
    %81 = arith.addf %78, %80 : vector<16x256xf32>
    %c0_88 = arith.constant 0 : index
    %c0_89 = arith.constant 0 : index
    %82 = vector.load %arg12[%c0_88, %c0_89] : memref<256x64xf32, #tpu.memory_space<vmem>>, vector<256x64xf32>
    %cst_90 = arith.constant dense<0.000000e+00> : vector<16x64xf32>
    %83 = tpu.matmul %81, %82, %cst_90 {dimension_numbers = #tpu.dot_dimension_numbers<[1], [0], [0], [1], [0, 0, 1, 1], [], []>} : vector<16x256xf32>, vector<256x64xf32>, vector<16x64xf32> -> vector<16x64xf32>
    %c0_91 = arith.constant 0 : index
    %c0_92 = arith.constant 0 : index
    %84 = vector.load %arg13[%c0_91, %c0_92] : memref<1x64xf32, #tpu.memory_space<vmem>>, vector<1x64xf32>
    %85 = vector.broadcast %84 : vector<1x64xf32> to vector<16x64xf32>
    %86 = arith.addf %83, %85 : vector<16x64xf32>
    %cst_93 = arith.constant 0.000000e+00 : f32
    %87 = vector.broadcast %cst_93 : f32 to vector<16x64xf32>
    %88 = arith.maximumf %86, %87 : vector<16x64xf32>
    %c1_94 = arith.constant 1 : index
    %c0_95 = arith.constant 0 : index
    %89 = vector.load %arg21[%c1_94, %c0_95] : memref<18x64xf32, #tpu.memory_space<vmem>>, vector<16x64xf32>
    tpu.vector_store %arg21[%c1_94, %c0_95], %88 {strides = array<i32>} : memref<18x64xf32, #tpu.memory_space<vmem>>, vector<16x64xf32>,
    %c0_96 = arith.constant 0 : index
    %c0_97 = arith.constant 0 : index
    %90 = vector.load %arg21[%c0_96, %c0_97] : memref<18x64xf32, #tpu.memory_space<vmem>>, vector<16x64xf32>
    %c0_98 = arith.constant 0 : index
    %c0_99 = arith.constant 0 : index
    %c0_100 = arith.constant 0 : index
    %91 = vector.load %arg14[%c0_98, %c0_99, %c0_100] : memref<3x64x64xf32, #tpu.memory_space<vmem>>, vector<1x64x64xf32>
    %92 = vector.shape_cast %91 : vector<1x64x64xf32> to vector<64x64xf32>
    %cst_101 = arith.constant dense<0.000000e+00> : vector<16x64xf32>
    %93 = tpu.matmul %90, %92, %cst_101 {dimension_numbers = #tpu.dot_dimension_numbers<[1], [0], [0], [1], [0, 0, 1, 1], [], []>} : vector<16x64xf32>, vector<64x64xf32>, vector<16x64xf32> -> vector<16x64xf32>
    %c1_102 = arith.constant 1 : index
    %c0_103 = arith.constant 0 : index
    %94 = vector.load %arg21[%c1_102, %c0_103] : memref<18x64xf32, #tpu.memory_space<vmem>>, vector<16x64xf32>
    %c1_104 = arith.constant 1 : index
    %c0_105 = arith.constant 0 : index
    %c0_106 = arith.constant 0 : index
    %95 = vector.load %arg14[%c1_104, %c0_105, %c0_106] : memref<3x64x64xf32, #tpu.memory_space<vmem>>, vector<1x64x64xf32>
    %96 = vector.shape_cast %95 : vector<1x64x64xf32> to vector<64x64xf32>
    %cst_107 = arith.constant dense<0.000000e+00> : vector<16x64xf32>
    %97 = tpu.matmul %94, %96, %cst_107 {dimension_numbers = #tpu.dot_dimension_numbers<[1], [0], [0], [1], [0, 0, 1, 1], [], []>} : vector<16x64xf32>, vector<64x64xf32>, vector<16x64xf32> -> vector<16x64xf32>
    %98 = arith.addf %93, %97 : vector<16x64xf32>
    %c2_108 = arith.constant 2 : index
    %c0_109 = arith.constant 0 : index
    %99 = vector.load %arg21[%c2_108, %c0_109] : memref<18x64xf32, #tpu.memory_space<vmem>>, vector<16x64xf32>
    %c2_110 = arith.constant 2 : index
    %c0_111 = arith.constant 0 : index
    %c0_112 = arith.constant 0 : index
    %100 = vector.load %arg14[%c2_110, %c0_111, %c0_112] : memref<3x64x64xf32, #tpu.memory_space<vmem>>, vector<1x64x64xf32>
    %101 = vector.shape_cast %100 : vector<1x64x64xf32> to vector<64x64xf32>
    %cst_113 = arith.constant dense<0.000000e+00> : vector<16x64xf32>
    %102 = tpu.matmul %99, %101, %cst_113 {dimension_numbers = #tpu.dot_dimension_numbers<[1], [0], [0], [1], [0, 0, 1, 1], [], []>} : vector<16x64xf32>, vector<64x64xf32>, vector<16x64xf32> -> vector<16x64xf32>
    %103 = arith.addf %98, %102 : vector<16x64xf32>
    %c0_114 = arith.constant 0 : index
    %c0_115 = arith.constant 0 : index
    %104 = vector.load %arg15[%c0_114, %c0_115] : memref<1x64xf32, #tpu.memory_space<vmem>>, vector<1x64xf32>
    %105 = vector.broadcast %104 : vector<1x64xf32> to vector<16x64xf32>
    %106 = arith.addf %103, %105 : vector<16x64xf32>
    %cst_116 = arith.constant 0.000000e+00 : f32
    %107 = vector.broadcast %cst_116 : f32 to vector<16x64xf32>
    %108 = arith.maximumf %106, %107 : vector<16x64xf32>
    %c1_117 = arith.constant 1 : index
    %c0_118 = arith.constant 0 : index
    %109 = vector.load %arg22[%c1_117, %c0_118] : memref<18x64xf32, #tpu.memory_space<vmem>>, vector<16x64xf32>
    tpu.vector_store %arg22[%c1_117, %c0_118], %108 {strides = array<i32>} : memref<18x64xf32, #tpu.memory_space<vmem>>, vector<16x64xf32>,
    %c0_119 = arith.constant 0 : index
    %c0_120 = arith.constant 0 : index
    %110 = vector.load %arg22[%c0_119, %c0_120] : memref<18x64xf32, #tpu.memory_space<vmem>>, vector<16x64xf32>
    %c0_121 = arith.constant 0 : index
    %c0_122 = arith.constant 0 : index
    %c0_123 = arith.constant 0 : index
    %111 = vector.load %arg16[%c0_121, %c0_122, %c0_123] : memref<3x64x64xf32, #tpu.memory_space<vmem>>, vector<1x64x64xf32>
    %112 = vector.shape_cast %111 : vector<1x64x64xf32> to vector<64x64xf32>
    %cst_124 = arith.constant dense<0.000000e+00> : vector<16x64xf32>
    %113 = tpu.matmul %110, %112, %cst_124 {dimension_numbers = #tpu.dot_dimension_numbers<[1], [0], [0], [1], [0, 0, 1, 1], [], []>} : vector<16x64xf32>, vector<64x64xf32>, vector<16x64xf32> -> vector<16x64xf32>
    %c1_125 = arith.constant 1 : index
    %c0_126 = arith.constant 0 : index
    %114 = vector.load %arg22[%c1_125, %c0_126] : memref<18x64xf32, #tpu.memory_space<vmem>>, vector<16x64xf32>
    %c1_127 = arith.constant 1 : index
    %c0_128 = arith.constant 0 : index
    %c0_129 = arith.constant 0 : index
    %115 = vector.load %arg16[%c1_127, %c0_128, %c0_129] : memref<3x64x64xf32, #tpu.memory_space<vmem>>, vector<1x64x64xf32>
    %116 = vector.shape_cast %115 : vector<1x64x64xf32> to vector<64x64xf32>
    %cst_130 = arith.constant dense<0.000000e+00> : vector<16x64xf32>
    %117 = tpu.matmul %114, %116, %cst_130 {dimension_numbers = #tpu.dot_dimension_numbers<[1], [0], [0], [1], [0, 0, 1, 1], [], []>} : vector<16x64xf32>, vector<64x64xf32>, vector<16x64xf32> -> vector<16x64xf32>
    %118 = arith.addf %113, %117 : vector<16x64xf32>
    %c2_131 = arith.constant 2 : index
    %c0_132 = arith.constant 0 : index
    %119 = vector.load %arg22[%c2_131, %c0_132] : memref<18x64xf32, #tpu.memory_space<vmem>>, vector<16x64xf32>
    %c2_133 = arith.constant 2 : index
    %c0_134 = arith.constant 0 : index
    %c0_135 = arith.constant 0 : index
    %120 = vector.load %arg16[%c2_133, %c0_134, %c0_135] : memref<3x64x64xf32, #tpu.memory_space<vmem>>, vector<1x64x64xf32>
    %121 = vector.shape_cast %120 : vector<1x64x64xf32> to vector<64x64xf32>
    %cst_136 = arith.constant dense<0.000000e+00> : vector<16x64xf32>
    %122 = tpu.matmul %119, %121, %cst_136 {dimension_numbers = #tpu.dot_dimension_numbers<[1], [0], [0], [1], [0, 0, 1, 1], [], []>} : vector<16x64xf32>, vector<64x64xf32>, vector<16x64xf32> -> vector<16x64xf32>
    %123 = arith.addf %118, %122 : vector<16x64xf32>
    %c0_137 = arith.constant 0 : index
    %c0_138 = arith.constant 0 : index
    %124 = vector.load %arg17[%c0_137, %c0_138] : memref<1x64xf32, #tpu.memory_space<vmem>>, vector<1x64xf32>
    %125 = vector.broadcast %124 : vector<1x64xf32> to vector<16x64xf32>
    %126 = arith.addf %123, %125 : vector<16x64xf32>
    %cst_139 = arith.constant 0.000000e+00 : f32
    %127 = vector.broadcast %cst_139 : f32 to vector<16x64xf32>
    %128 = arith.maximumf %126, %127 : vector<16x64xf32>
    %c1_140 = arith.constant 1 : index
    %c0_141 = arith.constant 0 : index
    %129 = vector.load %arg21[%c1_140, %c0_141] : memref<18x64xf32, #tpu.memory_space<vmem>>, vector<16x64xf32>
    tpu.vector_store %arg21[%c1_140, %c0_141], %128 {strides = array<i32>} : memref<18x64xf32, #tpu.memory_space<vmem>>, vector<16x64xf32>,
    %c0_142 = arith.constant 0 : index
    %c0_143 = arith.constant 0 : index
    %130 = vector.load %arg21[%c0_142, %c0_143] : memref<18x64xf32, #tpu.memory_space<vmem>>, vector<16x64xf32>
    %c0_144 = arith.constant 0 : index
    %c0_145 = arith.constant 0 : index
    %c0_146 = arith.constant 0 : index
    %131 = vector.load %arg18[%c0_144, %c0_145, %c0_146] : memref<3x64x256xf32, #tpu.memory_space<vmem>>, vector<1x64x256xf32>
    %132 = vector.shape_cast %131 : vector<1x64x256xf32> to vector<64x256xf32>
    %cst_147 = arith.constant dense<0.000000e+00> : vector<16x256xf32>
    %133 = tpu.matmul %130, %132, %cst_147 {dimension_numbers = #tpu.dot_dimension_numbers<[1], [0], [0], [1], [0, 0, 1, 1], [], []>} : vector<16x64xf32>, vector<64x256xf32>, vector<16x256xf32> -> vector<16x256xf32>
    %c1_148 = arith.constant 1 : index
    %c0_149 = arith.constant 0 : index
    %134 = vector.load %arg21[%c1_148, %c0_149] : memref<18x64xf32, #tpu.memory_space<vmem>>, vector<16x64xf32>
    %c1_150 = arith.constant 1 : index
    %c0_151 = arith.constant 0 : index
    %c0_152 = arith.constant 0 : index
    %135 = vector.load %arg18[%c1_150, %c0_151, %c0_152] : memref<3x64x256xf32, #tpu.memory_space<vmem>>, vector<1x64x256xf32>
    %136 = vector.shape_cast %135 : vector<1x64x256xf32> to vector<64x256xf32>
    %cst_153 = arith.constant dense<0.000000e+00> : vector<16x256xf32>
    %137 = tpu.matmul %134, %136, %cst_153 {dimension_numbers = #tpu.dot_dimension_numbers<[1], [0], [0], [1], [0, 0, 1, 1], [], []>} : vector<16x64xf32>, vector<64x256xf32>, vector<16x256xf32> -> vector<16x256xf32>
    %138 = arith.addf %133, %137 : vector<16x256xf32>
    %c2_154 = arith.constant 2 : index
    %c0_155 = arith.constant 0 : index
    %139 = vector.load %arg21[%c2_154, %c0_155] : memref<18x64xf32, #tpu.memory_space<vmem>>, vector<16x64xf32>
    %c2_156 = arith.constant 2 : index
    %c0_157 = arith.constant 0 : index
    %c0_158 = arith.constant 0 : index
    %140 = vector.load %arg18[%c2_156, %c0_157, %c0_158] : memref<3x64x256xf32, #tpu.memory_space<vmem>>, vector<1x64x256xf32>
    %141 = vector.shape_cast %140 : vector<1x64x256xf32> to vector<64x256xf32>
    %cst_159 = arith.constant dense<0.000000e+00> : vector<16x256xf32>
    %142 = tpu.matmul %139, %141, %cst_159 {dimension_numbers = #tpu.dot_dimension_numbers<[1], [0], [0], [1], [0, 0, 1, 1], [], []>} : vector<16x64xf32>, vector<64x256xf32>, vector<16x256xf32> -> vector<16x256xf32>
    %143 = arith.addf %138, %142 : vector<16x256xf32>
    %c0_160 = arith.constant 0 : index
    %c0_161 = arith.constant 0 : index
    %144 = vector.load %arg19[%c0_160, %c0_161] : memref<1x256xf32, #tpu.memory_space<vmem>>, vector<1x256xf32>
    %145 = vector.broadcast %144 : vector<1x256xf32> to vector<16x256xf32>
    %146 = arith.addf %143, %145 : vector<16x256xf32>
    %cst_162 = arith.constant 0.000000e+00 : f32
    %147 = vector.broadcast %cst_162 : f32 to vector<16x256xf32>
    %148 = arith.maximumf %146, %147 : vector<16x256xf32>
    %cst_163 = arith.constant 6.250000e-02 : f32
    %149 = vector.broadcast %cst_163 : f32 to vector<16x256xf32>
    %150 = arith.mulf %149, %148 : vector<16x256xf32>
    %151 = arith.addf %81, %150 : vector<16x256xf32>
    %c0_164 = arith.constant 0 : index
    %c0_165 = arith.constant 0 : index
    %c0_166 = arith.constant 0 : index
    %152 = vector.load %arg20[%c0_164, %c0_165, %c0_166] : memref<1x16x256xf32, #tpu.memory_space<vmem>>, vector<1x16x256xf32>
    %153 = vector.shape_cast %152 : vector<1x16x256xf32> to vector<16x256xf32>
    %154 = vector.shape_cast %151 : vector<16x256xf32> to vector<1x16x256xf32>
    tpu.vector_store %arg20[%c0_164, %c0_165, %c0_166], %154 {strides = array<i32>} : memref<1x16x256xf32, #tpu.memory_space<vmem>>, vector<1x16x256xf32>,
    return
  }
  func.func @transform_0(%arg0: i32) -> (i32, i32, i32) {
    %c0_i32 = arith.constant 0 : i32
    %c0_i32_0 = arith.constant 0 : i32
    %c0_i32_1 = arith.constant 0 : i32
    return %arg0, %c0_i32, %c0_i32_0 : i32, i32, i32
  }
  func.func @transform_1(%arg0: i32) -> (i32, i32) {
    %c0_i32 = arith.constant 0 : i32
    %c0_i32_0 = arith.constant 0 : i32
    %c0_i32_1 = arith.constant 0 : i32
    return %c0_i32, %c0_i32_0 : i32, i32
  }
  func.func @transform_2(%arg0: i32) -> (i32, i32) {
    %c0_i32 = arith.constant 0 : i32
    %c0_i32_0 = arith.constant 0 : i32
    %c0_i32_1 = arith.constant 0 : i32
    return %c0_i32, %c0_i32_0 : i32, i32
  }
  func.func @transform_3(%arg0: i32) -> (i32, i32) {
    %c0_i32 = arith.constant 0 : i32
    %c0_i32_0 = arith.constant 0 : i32
    %c0_i32_1 = arith.constant 0 : i32
    return %c0_i32, %c0_i32_0 : i32, i32
  }
  func.func @transform_4(%arg0: i32) -> (i32, i32) {
    %c0_i32 = arith.constant 0 : i32
    %c0_i32_0 = arith.constant 0 : i32
    %c0_i32_1 = arith.constant 0 : i32
    return %c0_i32, %c0_i32_0 : i32, i32
  }
  func.func @transform_5(%arg0: i32) -> (i32, i32, i32) {
    %c0_i32 = arith.constant 0 : i32
    %c0_i32_0 = arith.constant 0 : i32
    %c0_i32_1 = arith.constant 0 : i32
    %c0_i32_2 = arith.constant 0 : i32
    return %c0_i32, %c0_i32_0, %c0_i32_1 : i32, i32, i32
  }
  func.func @transform_6(%arg0: i32) -> (i32, i32) {
    %c0_i32 = arith.constant 0 : i32
    %c0_i32_0 = arith.constant 0 : i32
    %c0_i32_1 = arith.constant 0 : i32
    return %c0_i32, %c0_i32_0 : i32, i32
  }
  func.func @transform_7(%arg0: i32) -> (i32, i32, i32) {
    %c0_i32 = arith.constant 0 : i32
    %c0_i32_0 = arith.constant 0 : i32
    %c0_i32_1 = arith.constant 0 : i32
    %c0_i32_2 = arith.constant 0 : i32
    return %c0_i32, %c0_i32_0, %c0_i32_1 : i32, i32, i32
  }
  func.func @transform_8(%arg0: i32) -> (i32, i32) {
    %c0_i32 = arith.constant 0 : i32
    %c0_i32_0 = arith.constant 0 : i32
    %c0_i32_1 = arith.constant 0 : i32
    return %c0_i32, %c0_i32_0 : i32, i32
  }
  func.func @transform_9(%arg0: i32) -> (i32, i32, i32) {
    %c0_i32 = arith.constant 0 : i32
    %c0_i32_0 = arith.constant 0 : i32
    %c0_i32_1 = arith.constant 0 : i32
    %c0_i32_2 = arith.constant 0 : i32
    return %c0_i32, %c0_i32_0, %c0_i32_1 : i32, i32, i32
  }
  func.func @transform_10(%arg0: i32) -> (i32, i32) {
    %c0_i32 = arith.constant 0 : i32
    %c0_i32_0 = arith.constant 0 : i32
    %c0_i32_1 = arith.constant 0 : i32
    return %c0_i32, %c0_i32_0 : i32, i32
  }
  func.func @transform_11(%arg0: i32) -> (i32, i32) {
    %c0_i32 = arith.constant 0 : i32
    %c0_i32_0 = arith.constant 0 : i32
    %c0_i32_1 = arith.constant 0 : i32
    return %c0_i32, %c0_i32_0 : i32, i32
  }
  func.func @transform_12(%arg0: i32) -> (i32, i32) {
    %c0_i32 = arith.constant 0 : i32
    %c0_i32_0 = arith.constant 0 : i32
    %c0_i32_1 = arith.constant 0 : i32
    return %c0_i32, %c0_i32_0 : i32, i32
  }
  func.func @transform_13(%arg0: i32) -> (i32, i32, i32) {
    %c0_i32 = arith.constant 0 : i32
    %c0_i32_0 = arith.constant 0 : i32
    %c0_i32_1 = arith.constant 0 : i32
    %c0_i32_2 = arith.constant 0 : i32
    return %c0_i32, %c0_i32_0, %c0_i32_1 : i32, i32, i32
  }
  func.func @transform_14(%arg0: i32) -> (i32, i32) {
    %c0_i32 = arith.constant 0 : i32
    %c0_i32_0 = arith.constant 0 : i32
    %c0_i32_1 = arith.constant 0 : i32
    return %c0_i32, %c0_i32_0 : i32, i32
  }
  func.func @transform_15(%arg0: i32) -> (i32, i32, i32) {
    %c0_i32 = arith.constant 0 : i32
    %c0_i32_0 = arith.constant 0 : i32
    %c0_i32_1 = arith.constant 0 : i32
    %c0_i32_2 = arith.constant 0 : i32
    return %c0_i32, %c0_i32_0, %c0_i32_1 : i32, i32, i32
  }
  func.func @transform_16(%arg0: i32) -> (i32, i32) {
    %c0_i32 = arith.constant 0 : i32
    %c0_i32_0 = arith.constant 0 : i32
    %c0_i32_1 = arith.constant 0 : i32
    return %c0_i32, %c0_i32_0 : i32, i32
  }
  func.func @transform_17(%arg0: i32) -> (i32, i32, i32) {
    %c0_i32 = arith.constant 0 : i32
    %c0_i32_0 = arith.constant 0 : i32
    %c0_i32_1 = arith.constant 0 : i32
    %c0_i32_2 = arith.constant 0 : i32
    return %c0_i32, %c0_i32_0, %c0_i32_1 : i32, i32, i32
  }
  func.func @transform_18(%arg0: i32) -> (i32, i32) {
    %c0_i32 = arith.constant 0 : i32
    %c0_i32_0 = arith.constant 0 : i32
    %c0_i32_1 = arith.constant 0 : i32
    return %c0_i32, %c0_i32_0 : i32, i32
  }
  func.func @transform_19(%arg0: i32) -> (i32, i32, i32) {
    %c0_i32 = arith.constant 0 : i32
    %c0_i32_0 = arith.constant 0 : i32
    %c0_i32_1 = arith.constant 0 : i32
    return %arg0, %c0_i32, %c0_i32_0 : i32, i32, i32
  }
}

</mosaic_0001>

<llo_original>
// kernel: tpu_custom_call.1
$region0: #{tpu_custom_call.1}
  #allocation0 [shape = 'u32[]', space=smem, size = 0x4, offset = 0x4, fixed_abs, tag = 'smem constant byte address 0x4 - core index']
  #allocation1 [shape = 'u32[72,128]{1,0:T(1,128)}', space=vmem, size = 0x9000, scoped, tag = 'internal scratch']
  #allocation2 [shape = 'f32[18,64]{1,0:T(8,128)}', space=vmem, size = 0x3000, scoped, tag = 'scratch operand']
  #allocation3 [shape = 'f32[18,64]{1,0:T(8,128)}', space=vmem, size = 0x3000, scoped, tag = 'scratch operand']
  %s0 = inlined_call_operand.hbm [shape: f32[2,16,64], index: 0, kind: input, shape index: {}]
  %s1 = inlined_call_operand.hbm [shape: f32[64,256], index: 1, kind: input, shape index: {}]
  %s2 = inlined_call_operand.vmem [shape: f32[1,256], index: 2, kind: input, shape index: {}]
  %s3 = inlined_call_operand.hbm [shape: f32[64,64], index: 3, kind: input, shape index: {}]
  %s4 = inlined_call_operand.vmem [shape: f32[1,64], index: 4, kind: input, shape index: {}]
  %s5 = inlined_call_operand.hbm [shape: f32[3,64,64], index: 5, kind: input, shape index: {}]
  %s6 = inlined_call_operand.vmem [shape: f32[1,64], index: 6, kind: input, shape index: {}]
  %s7 = inlined_call_operand.hbm [shape: f32[3,64,64], index: 7, kind: input, shape index: {}]
  %s8 = inlined_call_operand.hbm [shape: f32[1,64], index: 8, kind: input, shape index: {}]
  %s9 = inlined_call_operand.vmem [shape: f32[3,64,256], index: 9, kind: input, shape index: {}]
  %s10 = inlined_call_operand.vmem [shape: f32[1,256], index: 10, kind: input, shape index: {}]
  %s11 = inlined_call_operand.vmem [shape: f32[256,64], index: 11, kind: input, shape index: {}]
  %s12 = inlined_call_operand.vmem [shape: f32[1,64], index: 12, kind: input, shape index: {}]
  %s13 = inlined_call_operand.hbm [shape: f32[3,64,64], index: 13, kind: input, shape index: {}]
  %s14 = inlined_call_operand.hbm [shape: f32[1,64], index: 14, kind: input, shape index: {}]
  %s15 = inlined_call_operand.hbm [shape: f32[3,64,64], index: 15, kind: input, shape index: {}]
  %s16 = inlined_call_operand.vmem [shape: f32[1,64], index: 16, kind: input, shape index: {}]
  %s17 = inlined_call_operand.hbm [shape: f32[3,64,256], index: 17, kind: input, shape index: {}]
  %s18 = inlined_call_operand.vmem [shape: f32[1,256], index: 18, kind: input, shape index: {}]
  %s19 = inlined_call_operand.hbm [shape: f32[2,16,256], index: 19, kind: output, shape index: {}]
  %s20 = sld [smem:[#allocation0]]
  $region149: #{tpu_custom_call.1} parent=0
    _
  %s22 = ssub.s32 1, %s20
  %s23 = scalar_select 0, %s22, %s20
  $region1: #{tpu_custom_call.1} parent=0
    #allocation4 [shape = 'u8[16384]{0}', space=vmem, size = 0x4000, scoped, tag = 'input window, operand 0']
    #allocation5 [shape = 's32[2]{0}', space=sflag, size = 0x8, scoped, tag = 'scoped memory for tpu_custom_call.1']
    #allocation6 [shape = 's32[2]{0}', space=sflag, size = 0x8, scoped, tag = 'scoped memory for tpu_custom_call.1']
    #allocation7 [shape = 'u8[65536]{0}', space=vmem, size = 0x10000, scoped, tag = 'input window, operand 1, single buffered']
    #allocation8 [shape = 's32[1]{0}', space=sflag, size = 0x4, scoped, tag = 'scoped memory for tpu_custom_call.1']
    #allocation9 [shape = 'u8[32768]{0}', space=vmem, size = 0x8000, scoped, tag = 'input window, operand 3, single buffered']
    #allocation10 [shape = 'u8[98304]{0}', space=vmem, size = 0x18000, scoped, tag = 'input window, operand 5, single buffered']
    #allocation11 [shape = 's32[1]{0}', space=sflag, size = 0x4, scoped, tag = 'scoped memory for tpu_custom_call.1']
    #allocation12 [shape = 'u8[98304]{0}', space=vmem, size = 0x18000, scoped, tag = 'input window, operand 7, single buffered']
    #allocation13 [shape = 'u8[512]{0}', space=vmem, size = 0x400, scoped, tag = 'input window, operand 8, single buffered']
    #allocation14 [shape = 's32[1]{0}', space=sflag, size = 0x4, scoped, tag = 'scoped memory for tpu_custom_call.1']
    #allocation15 [shape = 'u8[98304]{0}', space=vmem, size = 0x18000, scoped, tag = 'input window, operand 13, single buffered']
    #allocation16 [shape = 'u8[512]{0}', space=vmem, size = 0x400, scoped, tag = 'input window, operand 14, single buffered']
    #allocation17 [shape = 's32[1]{0}', space=sflag, size = 0x4, scoped, tag = 'scoped memory for tpu_custom_call.1']
    #allocation18 [shape = 'u8[98304]{0}', space=vmem, size = 0x18000, scoped, tag = 'input window, operand 15, single buffered']
    #allocation19 [shape = 'u8[196608]{0}', space=vmem, size = 0x30000, scoped, tag = 'input window, operand 17, single buffered']
    #allocation20 [shape = 's32[1]{0}', space=sflag, size = 0x4, scoped, tag = 'scoped memory for tpu_custom_call.1']
    #allocation21 [shape = 'u8[32768]{0}', space=vmem, size = 0x8000, scoped, tag = 'output window, operand 0']
    %24 = vsyncpa [#allocation5], 0
    %s25 = scalar_lea.sflag [#allocation5], 1
    %26 = vsyncpa %s25, 0
    %27 = vsyncpa [#allocation8], 0
    %28 = vsyncpa [#allocation11], 0
    %29 = vsyncpa [#allocation14], 0
    %30 = vsyncpa [#allocation17], 0
    %31 = vsyncpa [#allocation20], 0
    %32 = vsyncpa [#allocation6], 0
    %s33 = scalar_lea.sflag [#allocation6], 1
    %34 = vsyncpa %s33, 0
    loop: start=0, step=1, limit=4
    $region2: #{tpu_custom_call.1} parent=1 // loop_pre_header
      _
    $region3: #{tpu_custom_call.1} parent=1 // loop_header
      %s36 = sphi 0, %s40
      %p37 = scmp.ge.s32.totalorder %s36, 4
      %s46 = sphi 0, %s48
      %s49 = sphi 0, %s46
      %s50 = sphi 0, %s49
      %s66 = sphi 0, %s50
      %s70 = sphi 0, %s70
      %s72 = sphi 0, %s70
      %s73 = sphi 0, %s72
      %s87 = sphi 0, %s73
      %s91 = sphi 0, %s91
      %s93 = sphi 0, %s91
      %s94 = sphi 0, %s93
      %s108 = sphi 0, %s94
      %s112 = sphi 0, %s112
      %s114 = sphi 0, %s112
      %s115 = sphi 0, %s114
      %s129 = sphi 0, %s115
      %s133 = sphi 0, %s133
      %s135 = sphi 0, %s133
      %s136 = sphi 0, %s135
      %s150 = sphi 0, %s136
      %s154 = sphi 0, %s154
      %s156 = sphi 0, %s154
      %s157 = sphi 0, %s156
      %s171 = sphi 0, %s157
      %s175 = sphi 0, %s175
      %s177 = sphi 0, %s175
      %s178 = sphi 0, %s177
      %s192 = sphi 0, %s178
      %s196 = sphi 0, %s196
      %s198 = sphi 0, %s196
      %s199 = sphi 0, %s198
      %s213 = sphi 0, %s199
      %s217 = sphi 0, %s217
      %s219 = sphi 0, %s217
      %s220 = sphi 0, %s219
      %s234 = sphi 0, %s220
      %s238 = sphi 0, %s238
      %s240 = sphi 0, %s238
      %s241 = sphi 0, %s240
      %s255 = sphi 0, %s241
      %s259 = sphi 0, %s259
      %s261 = sphi 0, %s259
      %s262 = sphi 0, %s261
      %s276 = sphi 0, %s262
      %s280 = sphi 0, %s280
      %s282 = sphi 0, %s280
      %s283 = sphi 0, %s282
      %s297 = sphi 0, %s283
      %s301 = sphi 0, %s301
      %s303 = sphi 0, %s301
      %s304 = sphi 0, %s303
      %s318 = sphi 0, %s304
      %s322 = sphi 0, %s322
      %s324 = sphi 0, %s322
      %s325 = sphi 0, %s324
      %s339 = sphi 0, %s325
      %s343 = sphi 0, %s343
      %s345 = sphi 0, %s343
      %s346 = sphi 0, %s345
      %s360 = sphi 0, %s346
      %s364 = sphi 0, %s364
      %s366 = sphi 0, %s364
      %s367 = sphi 0, %s366
      %s381 = sphi 0, %s367
      %s385 = sphi 0, %s385
      %s387 = sphi 0, %s385
      %s388 = sphi 0, %s387
      %s402 = sphi 0, %s388
      %s406 = sphi 0, %s406
      %s408 = sphi 0, %s406
      %s409 = sphi 0, %s408
      %s423 = sphi 0, %s409
      %s427 = sphi 0, %s427
      %s429 = sphi 0, %s427
      %s430 = sphi 0, %s429
      %s444 = sphi 0, %s430
      %s450 = sphi 0, %s452
      %s453 = sphi 0, %s450
      %s454 = sphi 0, %s453
      %s470 = sphi 0, %s454
    $region4: #{tpu_custom_call.1} parent=1 // loop_header_branch
      %39 = sbr.rel (%p37) target = $region8
    $region5: #{tpu_custom_call.1} parent=1 // loop_body
      %s41 = ssub.s32 %s36, 1
      %s42 = ssub.s32 %s36, 2
      %s43 = sadd.s32 %s36, 1
      %s44 = ssub.s32 %s36, %s43
      %p45 = scmp.eq.s32.totalorder %s44, 0
      %s47 = sadd.s32 %s46, 1
      %s48 = scalar_select %p45, %s46, %s47
      %p51 = pneg %p45
      %p52 = scmp.eq.s32.totalorder %s36, 1
      %p53 = por %p51, %p52
      %p54 = scmp.ne.s32.totalorder %s46, %s49
      %p55 = scmp.eq.s32.totalorder %s36, 0
      %p56 = por %p54, %p55
      %p57 = scmp.ne.s32.totalorder %s46, %s49
      %p58 = scmp.eq.s32.totalorder %s41, 1
      %p59 = por %p57, %p58
      %p60 = scmp.ne.s32.totalorder %s49, %s50
      %p61 = scmp.eq.s32.totalorder %s41, 0
      %p62 = por %p60, %p61
      %p63 = scmp.ne.s32.totalorder %s49, %s50
      %p64 = scmp.eq.s32.totalorder %s42, 1
      %p65 = por %p63, %p64
      %p67 = scmp.ne.s32.totalorder %s50, %s66
      %p68 = scmp.eq.s32.totalorder %s42, 0
      %p69 = por %p67, %p68
      %s71 = sadd.s32 %s70, 1
      %p74 = scmp.eq.s32.totalorder %s36, 1
      %p75 = scmp.ne.s32.totalorder %s70, %s72
      %p76 = scmp.eq.s32.totalorder %s36, 0
      %p77 = por %p75, %p76
      %p78 = scmp.ne.s32.totalorder %s70, %s72
      %p79 = scmp.eq.s32.totalorder %s41, 1
      %p80 = por %p78, %p79
      %p81 = scmp.ne.s32.totalorder %s72, %s73
      %p82 = scmp.eq.s32.totalorder %s41, 0
      %p83 = por %p81, %p82
      %p84 = scmp.ne.s32.totalorder %s72, %s73
      %p85 = scmp.eq.s32.totalorder %s42, 1
      %p86 = por %p84, %p85
      %p88 = scmp.ne.s32.totalorder %s73, %s87
      %p89 = scmp.eq.s32.totalorder %s42, 0
      %p90 = por %p88, %p89
      %s92 = sadd.s32 %s91, 1
      %p95 = scmp.eq.s32.totalorder %s36, 1
      %p96 = scmp.ne.s32.totalorder %s91, %s93
      %p97 = scmp.eq.s32.totalorder %s36, 0
      %p98 = por %p96, %p97
      %p99 = scmp.ne.s32.totalorder %s91, %s93
      %p100 = scmp.eq.s32.totalorder %s41, 1
      %p101 = por %p99, %p100
      %p102 = scmp.ne.s32.totalorder %s93, %s94
      %p103 = scmp.eq.s32.totalorder %s41, 0
      %p104 = por %p102, %p103
      %p105 = scmp.ne.s32.totalorder %s93, %s94
      %p106 = scmp.eq.s32.totalorder %s42, 1
      %p107 = por %p105, %p106
      %p109 = scmp.ne.s32.totalorder %s94, %s108
      %p110 = scmp.eq.s32.totalorder %s42, 0
      %p111 = por %p109, %p110
      %s113 = sadd.s32 %s112, 1
      %p116 = scmp.eq.s32.totalorder %s36, 1
      %p117 = scmp.ne.s32.totalorder %s112, %s114
      %p118 = scmp.eq.s32.totalorder %s36, 0
      %p119 = por %p117, %p118
      %p120 = scmp.ne.s32.totalorder %s112, %s114
      %p121 = scmp.eq.s32.totalorder %s41, 1
      %p122 = por %p120, %p121
      %p123 = scmp.ne.s32.totalorder %s114, %s115
      %p124 = scmp.eq.s32.totalorder %s41, 0
      %p125 = por %p123, %p124
      %p126 = scmp.ne.s32.totalorder %s114, %s115
      %p127 = scmp.eq.s32.totalorder %s42, 1
      %p128 = por %p126, %p127
      %p130 = scmp.ne.s32.totalorder %s115, %s129
      %p131 = scmp.eq.s32.totalorder %s42, 0
      %p132 = por %p130, %p131
      %s134 = sadd.s32 %s133, 1
      %p137 = scmp.eq.s32.totalorder %s36, 1
      %p138 = scmp.ne.s32.totalorder %s133, %s135
      %p139 = scmp.eq.s32.totalorder %s36, 0
      %p140 = por %p138, %p139
      %p141 = scmp.ne.s32.totalorder %s133, %s135
      %p142 = scmp.eq.s32.totalorder %s41, 1
      %p143 = por %p141, %p142
      %p144 = scmp.ne.s32.totalorder %s135, %s136
      %p145 = scmp.eq.s32.totalorder %s41, 0
      %p146 = por %p144, %p145
      %p147 = scmp.ne.s32.totalorder %s135, %s136
      %p148 = scmp.eq.s32.totalorder %s42, 1
      %p149 = por %p147, %p148
      %p151 = scmp.ne.s32.totalorder %s136, %s150
      %p152 = scmp.eq.s32.totalorder %s42, 0
      %p153 = por %p151, %p152
      %s155 = sadd.s32 %s154, 1
      %p158 = scmp.eq.s32.totalorder %s36, 1
      %p159 = scmp.ne.s32.totalorder %s154, %s156
      %p160 = scmp.eq.s32.totalorder %s36, 0
      %p161 = por %p159, %p160
      %p162 = scmp.ne.s32.totalorder %s154, %s156
      %p163 = scmp.eq.s32.totalorder %s41, 1
      %p164 = por %p162, %p163
      %p165 = scmp.ne.s32.totalorder %s156, %s157
      %p166 = scmp.eq.s32.totalorder %s41, 0
      %p167 = por %p165, %p166
      %p168 = scmp.ne.s32.totalorder %s156, %s157
      %p169 = scmp.eq.s32.totalorder %s42, 1
      %p170 = por %p168, %p169
      %p172 = scmp.ne.s32.totalorder %s157, %s171
      %p173 = scmp.eq.s32.totalorder %s42, 0
      %p174 = por %p172, %p173
      %s176 = sadd.s32 %s175, 1
      %p179 = scmp.eq.s32.totalorder %s36, 1
      %p180 = scmp.ne.s32.totalorder %s175, %s177
      %p181 = scmp.eq.s32.totalorder %s36, 0
      %p182 = por %p180, %p181
      %p183 = scmp.ne.s32.totalorder %s175, %s177
      %p184 = scmp.eq.s32.totalorder %s41, 1
      %p185 = por %p183, %p184
      %p186 = scmp.ne.s32.totalorder %s177, %s178
      %p187 = scmp.eq.s32.totalorder %s41, 0
      %p188 = por %p186, %p187
      %p189 = scmp.ne.s32.totalorder %s177, %s178
      %p190 = scmp.eq.s32.totalorder %s42, 1
      %p191 = por %p189, %p190
      %p193 = scmp.ne.s32.totalorder %s178, %s192
      %p194 = scmp.eq.s32.totalorder %s42, 0
      %p195 = por %p193, %p194
      %s197 = sadd.s32 %s196, 1
      %p200 = scmp.eq.s32.totalorder %s36, 1
      %p201 = scmp.ne.s32.totalorder %s196, %s198
      %p202 = scmp.eq.s32.totalorder %s36, 0
      %p203 = por %p201, %p202
      %p204 = scmp.ne.s32.totalorder %s196, %s198
      %p205 = scmp.eq.s32.totalorder %s41, 1
      %p206 = por %p204, %p205
      %p207 = scmp.ne.s32.totalorder %s198, %s199
      %p208 = scmp.eq.s32.totalorder %s41, 0
      %p209 = por %p207, %p208
      %p210 = scmp.ne.s32.totalorder %s198, %s199
      %p211 = scmp.eq.s32.totalorder %s42, 1
      %p212 = por %p210, %p211
      %p214 = scmp.ne.s32.totalorder %s199, %s213
      %p215 = scmp.eq.s32.totalorder %s42, 0
      %p216 = por %p214, %p215
      %s218 = sadd.s32 %s217, 1
      %p221 = scmp.eq.s32.totalorder %s36, 1
      %p222 = scmp.ne.s32.totalorder %s217, %s219
      %p223 = scmp.eq.s32.totalorder %s36, 0
      %p224 = por %p222, %p223
      %p225 = scmp.ne.s32.totalorder %s217, %s219
      %p226 = scmp.eq.s32.totalorder %s41, 1
      %p227 = por %p225, %p226
      %p228 = scmp.ne.s32.totalorder %s219, %s220
      %p229 = scmp.eq.s32.totalorder %s41, 0
      %p230 = por %p228, %p229
      %p231 = scmp.ne.s32.totalorder %s219, %s220
      %p232 = scmp.eq.s32.totalorder %s42, 1
      %p233 = por %p231, %p232
      %p235 = scmp.ne.s32.totalorder %s220, %s234
      %p236 = scmp.eq.s32.totalorder %s42, 0
      %p237 = por %p235, %p236
      %s239 = sadd.s32 %s238, 1
      %p242 = scmp.eq.s32.totalorder %s36, 1
      %p243 = scmp.ne.s32.totalorder %s238, %s240
      %p244 = scmp.eq.s32.totalorder %s36, 0
      %p245 = por %p243, %p244
      %p246 = scmp.ne.s32.totalorder %s238, %s240
      %p247 = scmp.eq.s32.totalorder %s41, 1
      %p248 = por %p246, %p247
      %p249 = scmp.ne.s32.totalorder %s240, %s241
      %p250 = scmp.eq.s32.totalorder %s41, 0
      %p251 = por %p249, %p250
      %p252 = scmp.ne.s32.totalorder %s240, %s241
      %p253 = scmp.eq.s32.totalorder %s42, 1
      %p254 = por %p252, %p253
      %p256 = scmp.ne.s32.totalorder %s241, %s255
      %p257 = scmp.eq.s32.totalorder %s42, 0
      %p258 = por %p256, %p257
      %s260 = sadd.s32 %s259, 1
      %p263 = scmp.eq.s32.totalorder %s36, 1
      %p264 = scmp.ne.s32.totalorder %s259, %s261
      %p265 = scmp.eq.s32.totalorder %s36, 0
      %p266 = por %p264, %p265
      %p267 = scmp.ne.s32.totalorder %s259, %s261
      %p268 = scmp.eq.s32.totalorder %s41, 1
      %p269 = por %p267, %p268
      %p270 = scmp.ne.s32.totalorder %s261, %s262
      %p271 = scmp.eq.s32.totalorder %s41, 0
      %p272 = por %p270, %p271
      %p273 = scmp.ne.s32.totalorder %s261, %s262
      %p274 = scmp.eq.s32.totalorder %s42, 1
      %p275 = por %p273, %p274
      %p277 = scmp.ne.s32.totalorder %s262, %s276
      %p278 = scmp.eq.s32.totalorder %s42, 0
      %p279 = por %p277, %p278
      %s281 = sadd.s32 %s280, 1
      %p284 = scmp.eq.s32.totalorder %s36, 1
      %p285 = scmp.ne.s32.totalorder %s280, %s282
      %p286 = scmp.eq.s32.totalorder %s36, 0
      %p287 = por %p285, %p286
      %p288 = scmp.ne.s32.totalorder %s280, %s282
      %p289 = scmp.eq.s32.totalorder %s41, 1
      %p290 = por %p288, %p289
      %p291 = scmp.ne.s32.totalorder %s282, %s283
      %p292 = scmp.eq.s32.totalorder %s41, 0
      %p293 = por %p291, %p292
      %p294 = scmp.ne.s32.totalorder %s282, %s283
      %p295 = scmp.eq.s32.totalorder %s42, 1
      %p296 = por %p294, %p295
      %p298 = scmp.ne.s32.totalorder %s283, %s297
      %p299 = scmp.eq.s32.totalorder %s42, 0
      %p300 = por %p298, %p299
      %s302 = sadd.s32 %s301, 1
      %p305 = scmp.eq.s32.totalorder %s36, 1
      %p306 = scmp.ne.s32.totalorder %s301, %s303
      %p307 = scmp.eq.s32.totalorder %s36, 0
      %p308 = por %p306, %p307
      %p309 = scmp.ne.s32.totalorder %s301, %s303
      %p310 = scmp.eq.s32.totalorder %s41, 1
      %p311 = por %p309, %p310
      %p312 = scmp.ne.s32.totalorder %s303, %s304
      %p313 = scmp.eq.s32.totalorder %s41, 0
      %p314 = por %p312, %p313
      %p315 = scmp.ne.s32.totalorder %s303, %s304
      %p316 = scmp.eq.s32.totalorder %s42, 1
      %p317 = por %p315, %p316
      %p319 = scmp.ne.s32.totalorder %s304, %s318
      %p320 = scmp.eq.s32.totalorder %s42, 0
      %p321 = por %p319, %p320
      %s323 = sadd.s32 %s322, 1
      %p326 = scmp.eq.s32.totalorder %s36, 1
      %p327 = scmp.ne.s32.totalorder %s322, %s324
      %p328 = scmp.eq.s32.totalorder %s36, 0
      %p329 = por %p327, %p328
      %p330 = scmp.ne.s32.totalorder %s322, %s324
      %p331 = scmp.eq.s32.totalorder %s41, 1
      %p332 = por %p330, %p331
      %p333 = scmp.ne.s32.totalorder %s324, %s325
      %p334 = scmp.eq.s32.totalorder %s41, 0
      %p335 = por %p333, %p334
      %p336 = scmp.ne.s32.totalorder %s324, %s325
      %p337 = scmp.eq.s32.totalorder %s42, 1
      %p338 = por %p336, %p337
      %p340 = scmp.ne.s32.totalorder %s325, %s339
      %p341 = scmp.eq.s32.totalorder %s42, 0
      %p342 = por %p340, %p341
      %s344 = sadd.s32 %s343, 1
      %p347 = scmp.eq.s32.totalorder %s36, 1
      %p348 = scmp.ne.s32.totalorder %s343, %s345
      %p349 = scmp.eq.s32.totalorder %s36, 0
      %p350 = por %p348, %p349
      %p351 = scmp.ne.s32.totalorder %s343, %s345
      %p352 = scmp.eq.s32.totalorder %s41, 1
      %p353 = por %p351, %p352
      %p354 = scmp.ne.s32.totalorder %s345, %s346
      %p355 = scmp.eq.s32.totalorder %s41, 0
      %p356 = por %p354, %p355
      %p357 = scmp.ne.s32.totalorder %s345, %s346
      %p358 = scmp.eq.s32.totalorder %s42, 1
      %p359 = por %p357, %p358
      %p361 = scmp.ne.s32.totalorder %s346, %s360
      %p362 = scmp.eq.s32.totalorder %s42, 0
      %p363 = por %p361, %p362
      %s365 = sadd.s32 %s364, 1
      %p368 = scmp.eq.s32.totalorder %s36, 1
      %p369 = scmp.ne.s32.totalorder %s364, %s366
      %p370 = scmp.eq.s32.totalorder %s36, 0
      %p371 = por %p369, %p370
      %p372 = scmp.ne.s32.totalorder %s364, %s366
      %p373 = scmp.eq.s32.totalorder %s41, 1
      %p374 = por %p372, %p373
      %p375 = scmp.ne.s32.totalorder %s366, %s367
      %p376 = scmp.eq.s32.totalorder %s41, 0
      %p377 = por %p375, %p376
      %p378 = scmp.ne.s32.totalorder %s366, %s367
      %p379 = scmp.eq.s32.totalorder %s42, 1
      %p380 = por %p378, %p379
      %p382 = scmp.ne.s32.totalorder %s367, %s381
      %p383 = scmp.eq.s32.totalorder %s42, 0
      %p384 = por %p382, %p383
      %s386 = sadd.s32 %s385, 1
      %p389 = scmp.eq.s32.totalorder %s36, 1
      %p390 = scmp.ne.s32.totalorder %s385, %s387
      %p391 = scmp.eq.s32.totalorder %s36, 0
      %p392 = por %p390, %p391
      %p393 = scmp.ne.s32.totalorder %s385, %s387
      %p394 = scmp.eq.s32.totalorder %s41, 1
      %p395 = por %p393, %p394
      %p396 = scmp.ne.s32.totalorder %s387, %s388
      %p397 = scmp.eq.s32.totalorder %s41, 0
      %p398 = por %p396, %p397
      %p399 = scmp.ne.s32.totalorder %s387, %s388
      %p400 = scmp.eq.s32.totalorder %s42, 1
      %p401 = por %p399, %p400
      %p403 = scmp.ne.s32.totalorder %s388, %s402
      %p404 = scmp.eq.s32.totalorder %s42, 0
      %p405 = por %p403, %p404
      %s407 = sadd.s32 %s406, 1
      %p410 = scmp.eq.s32.totalorder %s36, 1
      %p411 = scmp.ne.s32.totalorder %s406, %s408
      %p412 = scmp.eq.s32.totalorder %s36, 0
      %p413 = por %p411, %p412
      %p414 = scmp.ne.s32.totalorder %s406, %s408
      %p415 = scmp.eq.s32.totalorder %s41, 1
      %p416 = por %p414, %p415
      %p417 = scmp.ne.s32.totalorder %s408, %s409
      %p418 = scmp.eq.s32.totalorder %s41, 0
      %p419 = por %p417, %p418
      %p420 = scmp.ne.s32.totalorder %s408, %s409
      %p421 = scmp.eq.s32.totalorder %s42, 1
      %p422 = por %p420, %p421
      %p424 = scmp.ne.s32.totalorder %s409, %s423
      %p425 = scmp.eq.s32.totalorder %s42, 0
      %p426 = por %p424, %p425
      %s428 = sadd.s32 %s427, 1
      %p431 = scmp.eq.s32.totalorder %s36, 1
      %p432 = scmp.ne.s32.totalorder %s427, %s429
      %p433 = scmp.eq.s32.totalorder %s36, 0
      %p434 = por %p432, %p433
      %p435 = scmp.ne.s32.totalorder %s427, %s429
      %p436 = scmp.eq.s32.totalorder %s41, 1
      %p437 = por %p435, %p436
      %p438 = scmp.ne.s32.totalorder %s429, %s430
      %p439 = scmp.eq.s32.totalorder %s41, 0
      %p440 = por %p438, %p439
      %p441 = scmp.ne.s32.totalorder %s429, %s430
      %p442 = scmp.eq.s32.totalorder %s42, 1
      %p443 = por %p441, %p442
      %p445 = scmp.ne.s32.totalorder %s430, %s444
      %p446 = scmp.eq.s32.totalorder %s42, 0
      %p447 = por %p445, %p446
      %s448 = ssub.s32 %s36, %s43
      %p449 = scmp.eq.s32.totalorder %s448, 0
      %s451 = sadd.s32 %s450, 1
      %s452 = scalar_select %p449, %s450, %s451
      %p455 = pneg %p449
      %p456 = scmp.eq.s32.totalorder %s36, 1
      %p457 = por %p455, %p456
      %p458 = scmp.ne.s32.totalorder %s450, %s453
      %p459 = scmp.eq.s32.totalorder %s36, 0
      %p460 = por %p458, %p459
      %p461 = scmp.ne.s32.totalorder %s450, %s453
      %p462 = scmp.eq.s32.totalorder %s41, 1
      %p463 = por %p461, %p462
      %p464 = scmp.ne.s32.totalorder %s453, %s454
      %p465 = scmp.eq.s32.totalorder %s41, 0
      %p466 = por %p464, %p465
      %p467 = scmp.ne.s32.totalorder %s453, %s454
      %p468 = scmp.eq.s32.totalorder %s42, 1
      %p469 = por %p467, %p468
      %p471 = scmp.ne.s32.totalorder %s454, %s470
      %p472 = scmp.eq.s32.totalorder %s42, 0
      %p473 = por %p471, %p472
      %p474 = scmp.le.s32.totalorder 1, %s36
      %p475 = scmp.lt.s32.totalorder %s36, 3
      %p476 = pnand %p474, %p475
      %p477 = pneg %p476
      // Predicated region
      $region9: #{tpu_custom_call.1} parent=5 // pred_check
        _
      $region10: #{tpu_custom_call.1} parent=5 // pred_check_branch
        %479 = sbr.rel (%p476) target = $region12
      $region11: #{tpu_custom_call.1} parent=5 // pred_region
        %s480 = ssub.s32 %s36, 1
        // Predicated region
        $region13: #{tpu_custom_call.1} parent=11 // pred_check
          %p481 = pneg %p83
        $region14: #{tpu_custom_call.1} parent=11 // pred_check_branch
          %483 = sbr.rel (%p481) target = $region16
        $region15: #{tpu_custom_call.1} parent=11 // pred_region
          %485 = vsyncadd [#allocation8], 0
          %s486 = sshll.u32 %s1, 4
          %s487 = int_to_ptr.hbm [resolvable:$true] %s486
          %s488 = sshll.u32 [#allocation7], 4
          %s489 = int_to_ptr.vmem [resolvable:$true] %s488
          %494 = dma.hbm_to_vmem [thread:$0]  %s487, 2048, %s489, [#allocation8], 256, 256, 16
        $region16: #{tpu_custom_call.1} parent=11 // pred_fallthru
          _
        // Predicated region
        $region17: #{tpu_custom_call.1} parent=11 // pred_check
          %p495 = pneg %p104
        $region18: #{tpu_custom_call.1} parent=11 // pred_check_branch
          %497 = sbr.rel (%p495) target = $region20
        $region19: #{tpu_custom_call.1} parent=11 // pred_region
          _
        $region20: #{tpu_custom_call.1} parent=11 // pred_fallthru
          _
        // Predicated region
        $region21: #{tpu_custom_call.1} parent=11 // pred_check
          %p498 = pneg %p125
        $region22: #{tpu_custom_call.1} parent=11 // pred_check_branch
          %500 = sbr.rel (%p498) target = $region24
        $region23: #{tpu_custom_call.1} parent=11 // pred_region
          %502 = vsyncadd [#allocation8], 0
          %s503 = sshll.u32 %s3, 4
          %s504 = int_to_ptr.hbm [resolvable:$true] %s503
          %s505 = sshll.u32 [#allocation9], 4
          %s506 = int_to_ptr.vmem [resolvable:$true] %s505
          %511 = dma.hbm_to_vmem [thread:$0]  %s504, 1024, %s506, [#allocation8], 128, 128, 8
        $region24: #{tpu_custom_call.1} parent=11 // pred_fallthru
          _
        // Predicated region
        $region25: #{tpu_custom_call.1} parent=11 // pred_check
          %p512 = pneg %p146
        $region26: #{tpu_custom_call.1} parent=11 // pred_check_branch
          %514 = sbr.rel (%p512) target = $region28
        $region27: #{tpu_custom_call.1} parent=11 // pred_region
          _
        $region28: #{tpu_custom_call.1} parent=11 // pred_fallthru
          _
        // Predicated region
        $region29: #{tpu_custom_call.1} parent=11 // pred_check
          %p515 = pneg %p167
        $region30: #{tpu_custom_call.1} parent=11 // pred_check_branch
          %517 = sbr.rel (%p515) target = $region32
        $region31: #{tpu_custom_call.1} parent=11 // pred_region
          %519 = vsyncadd [#allocation11], 0
          %s520 = sshll.u32 %s5, 4
          %s521 = int_to_ptr.hbm [resolvable:$true] %s520
          %s522 = sshll.u32 [#allocation10], 4
          %s523 = int_to_ptr.vmem [resolvable:$true] %s522
          %528 = dma.hbm_to_vmem [thread:$0]  %s521, 3072, %s523, [#allocation11], 128, 128, 8
        $region32: #{tpu_custom_call.1} parent=11 // pred_fallthru
          _
        // Predicated region
        $region33: #{tpu_custom_call.1} parent=11 // pred_check
          %p529 = pneg %p188
        $region34: #{tpu_custom_call.1} parent=11 // pred_check_branch
          %531 = sbr.rel (%p529) target = $region36
        $region35: #{tpu_custom_call.1} parent=11 // pred_region
          _
        $region36: #{tpu_custom_call.1} parent=11 // pred_fallthru
          _
        // Predicated region
        $region37: #{tpu_custom_call.1} parent=11 // pred_check
          %p532 = pneg %p209
        $region38: #{tpu_custom_call.1} parent=11 // pred_check_branch
          %534 = sbr.rel (%p532) target = $region40
        $region39: #{tpu_custom_call.1} parent=11 // pred_region
          %536 = vsyncadd [#allocation11], 0
          %s537 = sshll.u32 %s7, 4
          %s538 = int_to_ptr.hbm [resolvable:$true] %s537
          %s539 = sshll.u32 [#allocation12], 4
          %s540 = int_to_ptr.vmem [resolvable:$true] %s539
          %545 = dma.hbm_to_vmem [thread:$0]  %s538, 3072, %s540, [#allocation11], 128, 128, 8
        $region40: #{tpu_custom_call.1} parent=11 // pred_fallthru
          _
        // Predicated region
        $region41: #{tpu_custom_call.1} parent=11 // pred_check
          %p546 = pneg %p230
        $region42: #{tpu_custom_call.1} parent=11 // pred_check_branch
          %548 = sbr.rel (%p546) target = $region44
        $region43: #{tpu_custom_call.1} parent=11 // pred_region
          %550 = vsyncadd [#allocation14], 0
          %s552 = sshll.u32 %s8, 4
          %s553 = int_to_ptr.hbm [resolvable:$true] %s552
          %s554 = sshll.u32 [#allocation13], 4
          %s555 = int_to_ptr.vmem [resolvable:$true] %s554
          %557 = dma.hbm_to_vmem [thread:$0]  %s553, 16, %s555, [#allocation14]
        $region44: #{tpu_custom_call.1} parent=11 // pred_fallthru
          _
        // Predicated region
        $region45: #{tpu_custom_call.1} parent=11 // pred_check
          %p558 = pneg %p251
        $region46: #{tpu_custom_call.1} parent=11 // pred_check_branch
          %560 = sbr.rel (%p558) target = $region48
        $region47: #{tpu_custom_call.1} parent=11 // pred_region
          _
        $region48: #{tpu_custom_call.1} parent=11 // pred_fallthru
          _
        // Predicated region
        $region49: #{tpu_custom_call.1} parent=11 // pred_check
          %p561 = pneg %p272
        $region50: #{tpu_custom_call.1} parent=11 // pred_check_branch
          %563 = sbr.rel (%p561) target = $region52
        $region51: #{tpu_custom_call.1} parent=11 // pred_region
          _
        $region52: #{tpu_custom_call.1} parent=11 // pred_fallthru
          _
        // Predicated region
        $region53: #{tpu_custom_call.1} parent=11 // pred_check
          %p564 = pneg %p293
        $region54: #{tpu_custom_call.1} parent=11 // pred_check_branch
          %566 = sbr.rel (%p564) target = $region56
        $region55: #{tpu_custom_call.1} parent=11 // pred_region
          _
        $region56: #{tpu_custom_call.1} parent=11 // pred_fallthru
          _
        // Predicated region
        $region57: #{tpu_custom_call.1} parent=11 // pred_check
          %p567 = pneg %p314
        $region58: #{tpu_custom_call.1} parent=11 // pred_check_branch
          %569 = sbr.rel (%p567) target = $region60
        $region59: #{tpu_custom_call.1} parent=11 // pred_region
          _
        $region60: #{tpu_custom_call.1} parent=11 // pred_fallthru
          _
        // Predicated region
        $region61: #{tpu_custom_call.1} parent=11 // pred_check
          %p570 = pneg %p335
        $region62: #{tpu_custom_call.1} parent=11 // pred_check_branch
          %572 = sbr.rel (%p570) target = $region64
        $region63: #{tpu_custom_call.1} parent=11 // pred_region
          %574 = vsyncadd [#allocation14], 0
          %s575 = sshll.u32 %s13, 4
          %s576 = int_to_ptr.hbm [resolvable:$true] %s575
          %s577 = sshll.u32 [#allocation15], 4
          %s578 = int_to_ptr.vmem [resolvable:$true] %s577
          %583 = dma.hbm_to_vmem [thread:$0]  %s576, 3072, %s578, [#allocation14], 128, 128, 8
        $region64: #{tpu_custom_call.1} parent=11 // pred_fallthru
          _
        // Predicated region
        $region65: #{tpu_custom_call.1} parent=11 // pred_check
          %p584 = pneg %p356
        $region66: #{tpu_custom_call.1} parent=11 // pred_check_branch
          %586 = sbr.rel (%p584) target = $region68
        $region67: #{tpu_custom_call.1} parent=11 // pred_region
          %588 = vsyncadd [#allocation17], 0
          %s590 = sshll.u32 %s14, 4
          %s591 = int_to_ptr.hbm [resolvable:$true] %s590
          %s592 = sshll.u32 [#allocation16], 4
          %s593 = int_to_ptr.vmem [resolvable:$true] %s592
          %595 = dma.hbm_to_vmem [thread:$0]  %s591, 16, %s593, [#allocation17]
        $region68: #{tpu_custom_call.1} parent=11 // pred_fallthru
          _
        // Predicated region
        $region69: #{tpu_custom_call.1} parent=11 // pred_check
          %p596 = pneg %p377
        $region70: #{tpu_custom_call.1} parent=11 // pred_check_branch
          %598 = sbr.rel (%p596) target = $region72
        $region71: #{tpu_custom_call.1} parent=11 // pred_region
          %600 = vsyncadd [#allocation17], 0
          %s601 = sshll.u32 %s15, 4
          %s602 = int_to_ptr.hbm [resolvable:$true] %s601
          %s603 = sshll.u32 [#allocation18], 4
          %s604 = int_to_ptr.vmem [resolvable:$true] %s603
          %609 = dma.hbm_to_vmem [thread:$0]  %s602, 3072, %s604, [#allocation17], 128, 128, 8
        $region72: #{tpu_custom_call.1} parent=11 // pred_fallthru
          _
        // Predicated region
        $region73: #{tpu_custom_call.1} parent=11 // pred_check
          %p610 = pneg %p398
        $region74: #{tpu_custom_call.1} parent=11 // pred_check_branch
          %612 = sbr.rel (%p610) target = $region76
        $region75: #{tpu_custom_call.1} parent=11 // pred_region
          _
        $region76: #{tpu_custom_call.1} parent=11 // pred_fallthru
          _
        // Predicated region
        $region77: #{tpu_custom_call.1} parent=11 // pred_check
          %p613 = pneg %p419
        $region78: #{tpu_custom_call.1} parent=11 // pred_check_branch
          %615 = sbr.rel (%p613) target = $region80
        $region79: #{tpu_custom_call.1} parent=11 // pred_region
          %617 = vsyncadd [#allocation20], 0
          %s618 = sshll.u32 %s17, 4
          %s619 = int_to_ptr.hbm [resolvable:$true] %s618
          %s620 = sshll.u32 [#allocation19], 4
          %s621 = int_to_ptr.vmem [resolvable:$true] %s620
          %626 = dma.hbm_to_vmem [thread:$0]  %s619, 6144, %s621, [#allocation20], 256, 256, 16
        $region80: #{tpu_custom_call.1} parent=11 // pred_fallthru
          _
        // Predicated region
        $region81: #{tpu_custom_call.1} parent=11 // pred_check
          %p627 = pneg %p440
        $region82: #{tpu_custom_call.1} parent=11 // pred_check_branch
          %629 = sbr.rel (%p627) target = $region84
        $region83: #{tpu_custom_call.1} parent=11 // pred_region
          _
        $region84: #{tpu_custom_call.1} parent=11 // pred_fallthru
          _
      $region12: #{tpu_custom_call.1} parent=5 // pred_fallthru
        _
      %p630 = scmp.lt.s32.totalorder %s36, 2
      // Predicated region
      $region85: #{tpu_custom_call.1} parent=5 // pred_check
        %p631 = pneg %p630
      $region86: #{tpu_custom_call.1} parent=5 // pred_check_branch
        %633 = sbr.rel (%p631) target = $region88
      $region87: #{tpu_custom_call.1} parent=5 // pred_region
        // Predicated region
        $region89: #{tpu_custom_call.1} parent=87 // pred_check
          %p634 = pneg %p56
        $region90: #{tpu_custom_call.1} parent=87 // pred_check_branch
          %636 = sbr.rel (%p634) target = $region92
        $region91: #{tpu_custom_call.1} parent=87 // pred_region
          %s637 = sand.u32 %s46, 1
          %s638 = scalar_lea.sflag [#allocation5], %s637
          %s639 = sand.u32 %s46, 1
          %s640 = smul.addr %s639, 16
          %s641 = scalar_lea.vmem [#allocation4], %s640
          %643 = vsyncadd %s638, 0
          %s644 = smul.addr %s36, 2
          %s645 = smul.addr %s644, 8
          %s646 = scalar_lea.hbm %s0, %s645
          %s647 = sshll.u32 %s646, 4
          %s648 = int_to_ptr.hbm [resolvable:$true] %s647
          %s649 = sshll.u32 %s641, 4
          %s650 = int_to_ptr.vmem [resolvable:$true] %s649
          %655 = dma.hbm_to_vmem [thread:$0]  %s648, 256, %s650, %s638, 128, 128, 8
        $region92: #{tpu_custom_call.1} parent=87 // pred_fallthru
          _
      $region88: #{tpu_custom_call.1} parent=5 // pred_fallthru
        _
      %p656 = scmp.le.s32.totalorder 1, %s36
      %p657 = scmp.lt.s32.totalorder %s36, 3
      %p658 = pnand %p656, %p657
      %p659 = pneg %p658
      // Predicated region
      $region93: #{tpu_custom_call.1} parent=5 // pred_check
        _
      $region94: #{tpu_custom_call.1} parent=5 // pred_check_branch
        %661 = sbr.rel (%p658) target = $region96
      $region95: #{tpu_custom_call.1} parent=5 // pred_region
        %s662 = ssub.s32 %s36, 1
        %s663 = sand.u32 %s49, 1
        %s664 = scalar_lea.sflag [#allocation5], %s663
        %s665 = sand.u32 %s49, 1
        %s666 = smul.addr %s665, 16
        %s667 = scalar_lea.vmem [#allocation4], %s666
        // Predicated region
        $region97: #{tpu_custom_call.1} parent=95 // pred_check
          %p668 = pneg %p62
        $region98: #{tpu_custom_call.1} parent=95 // pred_check_branch
          %670 = sbr.rel (%p668) target = $region100
        $region99: #{tpu_custom_call.1} parent=95 // pred_region
          %672 = dma.done %s664, 256
        $region100: #{tpu_custom_call.1} parent=95 // pred_fallthru
          _
        // Predicated region
        $region101: #{tpu_custom_call.1} parent=95 // pred_check
          %p673 = pneg %p83
        $region102: #{tpu_custom_call.1} parent=95 // pred_check_branch
          %675 = sbr.rel (%p673) target = $region104
        $region103: #{tpu_custom_call.1} parent=95 // pred_region
          %677 = dma.done [#allocation8], 2048
        $region104: #{tpu_custom_call.1} parent=95 // pred_fallthru
          _
        // Predicated region
        $region105: #{tpu_custom_call.1} parent=95 // pred_check
          %p678 = pneg %p125
        $region106: #{tpu_custom_call.1} parent=95 // pred_check_branch
          %680 = sbr.rel (%p678) target = $region108
        $region107: #{tpu_custom_call.1} parent=95 // pred_region
          %682 = dma.done [#allocation8], 1024
        $region108: #{tpu_custom_call.1} parent=95 // pred_fallthru
          _
        // Predicated region
        $region109: #{tpu_custom_call.1} parent=95 // pred_check
          %p683 = pneg %p167
        $region110: #{tpu_custom_call.1} parent=95 // pred_check_branch
          %685 = sbr.rel (%p683) target = $region112
        $region111: #{tpu_custom_call.1} parent=95 // pred_region
          %687 = dma.done [#allocation11], 3072
        $region112: #{tpu_custom_call.1} parent=95 // pred_fallthru
          _
        // Predicated region
        $region113: #{tpu_custom_call.1} parent=95 // pred_check
          %p688 = pneg %p209
        $region114: #{tpu_custom_call.1} parent=95 // pred_check_branch
          %690 = sbr.rel (%p688) target = $region116
        $region115: #{tpu_custom_call.1} parent=95 // pred_region
          %692 = dma.done [#allocation11], 3072
        $region116: #{tpu_custom_call.1} parent=95 // pred_fallthru
          _
        // Predicated region
        $region117: #{tpu_custom_call.1} parent=95 // pred_check
          %p693 = pneg %p230
        $region118: #{tpu_custom_call.1} parent=95 // pred_check_branch
          %695 = sbr.rel (%p693) target = $region120
        $region119: #{tpu_custom_call.1} parent=95 // pred_region
          %697 = dma.done [#allocation14], 16
        $region120: #{tpu_custom_call.1} parent=95 // pred_fallthru
          _
        // Predicated region
        $region121: #{tpu_custom_call.1} parent=95 // pred_check
          %p698 = pneg %p335
        $region122: #{tpu_custom_call.1} parent=95 // pred_check_branch
          %700 = sbr.rel (%p698) target = $region124
        $region123: #{tpu_custom_call.1} parent=95 // pred_region
          %702 = dma.done [#allocation14], 3072
        $region124: #{tpu_custom_call.1} parent=95 // pred_fallthru
          _
        // Predicated region
        $region125: #{tpu_custom_call.1} parent=95 // pred_check
          %p703 = pneg %p356
        $region126: #{tpu_custom_call.1} parent=95 // pred_check_branch
          %705 = sbr.rel (%p703) target = $region128
        $region127: #{tpu_custom_call.1} parent=95 // pred_region
          %707 = dma.done [#allocation17], 16
        $region128: #{tpu_custom_call.1} parent=95 // pred_fallthru
          _
        // Predicated region
        $region129: #{tpu_custom_call.1} parent=95 // pred_check
          %p708 = pneg %p377
        $region130: #{tpu_custom_call.1} parent=95 // pred_check_branch
          %710 = sbr.rel (%p708) target = $region132
        $region131: #{tpu_custom_call.1} parent=95 // pred_region
          %712 = dma.done [#allocation17], 3072
        $region132: #{tpu_custom_call.1} parent=95 // pred_fallthru
          _
        // Predicated region
        $region133: #{tpu_custom_call.1} parent=95 // pred_check
          %p713 = pneg %p419
        $region134: #{tpu_custom_call.1} parent=95 // pred_check_branch
          %715 = sbr.rel (%p713) target = $region136
        $region135: #{tpu_custom_call.1} parent=95 // pred_region
          %717 = dma.done [#allocation20], 6144
        $region136: #{tpu_custom_call.1} parent=95 // pred_fallthru
          _
        %s718 = sand.u32 %s49, 1
        %s719 = scalar_lea.sflag [#allocation5], %s718
        %s720 = sand.u32 %s49, 1
        %s721 = smul.addr %s720, 16
        %s722 = scalar_lea.vmem [#allocation4], %s721
        %p723 = pneg %p62
        %p724 = pneg %p59
        %p725 = pneg %p83
        %p726 = pneg %p80
        %p727 = pneg %p104
        %p728 = pneg %p101
        %p729 = pneg %p125
        %p730 = pneg %p122
        %p731 = pneg %p146
        %p732 = pneg %p143
        %p733 = pneg %p167
        %p734 = pneg %p164
        %p735 = pneg %p188
        %p736 = pneg %p185
        %p737 = pneg %p209
        %p738 = pneg %p206
        %p739 = pneg %p230
        %p740 = pneg %p227
        %p741 = pneg %p251
        %p742 = pneg %p248
        %p743 = pneg %p272
        %p744 = pneg %p269
        %p745 = pneg %p293
        %p746 = pneg %p290
        %p747 = pneg %p314
        %p748 = pneg %p311
        %p749 = pneg %p335
        %p750 = pneg %p332
        %p751 = pneg %p356
        %p752 = pneg %p353
        %p753 = pneg %p377
        %p754 = pneg %p374
        %p755 = pneg %p398
        %p756 = pneg %p395
        %p757 = pneg %p419
        %p758 = pneg %p416
        %p759 = pneg %p440
        %p760 = pneg %p437
        %p761 = pneg %p466
        %p762 = pneg %p463
        %s763 = sand.u32 %s453, 1
        %s764 = scalar_lea.sflag [#allocation6], %s763
        %s765 = sand.u32 %s453, 1
        %s766 = smul.addr %s765, 32
        %s767 = scalar_lea.vmem [#allocation21], %s766
        %vm768 = vcmask 516096
        %769 = vst.msk [vmem:[#allocation2] sm:$0x1] %vm768, 0.0
        %770 = vst.msk [vmem:[#allocation2 + $0x11] sm:$0x1] %vm768, 0.0
        %771 = vst.msk [vmem:[#allocation3] sm:$0x1] %vm768, 0.0
        %772 = vst.msk [vmem:[#allocation3 + $0x11] sm:$0x1] %vm768, 0.0
        %v773 = vld [vmem:[%s667] sm:$0xff]
        %v774 = vld [vmem:[%s667 + $0x8] sm:$0xff]
        %v775 = vld [vmem:[#allocation9] sm:$0xff]
        %v776 = vld [vmem:[#allocation9 + $0x8] sm:$0xff]
        %v777 = vld [vmem:[#allocation9 + $0x10] sm:$0xff]
        %v778 = vld [vmem:[#allocation9 + $0x18] sm:$0xff]
        %v779 = vld [vmem:[#allocation9 + $0x20] sm:$0xff]
        %v780 = vld [vmem:[#allocation9 + $0x28] sm:$0xff]
        %v781 = vld [vmem:[#allocation9 + $0x30] sm:$0xff]
        %v782 = vld [vmem:[#allocation9 + $0x38] sm:$0xff]
        %v783 = vld [vmem:[%s4] sm:$0x1]
        %v785 = vperm.slane %v783, 0
        %vm787 = vcmask 523264
        %v789 = vsel %vm787, %v773, 0
        %v792 = vsel %vm787, %v774, 0
        %794 = vmatpush.msra.mxu0 0.0
        %795 = vmatpush.msra.mxu0 0.0
        %796 = vmatpush.msra.mxu0 0.0
        %797 = vmatpush.msra.mxu0 0.0
        %798 = vmatpush.msra.mxu0 0.0
        %799 = vmatpush.msra.mxu0 0.0
        %800 = vmatpush.msra.mxu0 0.0
        %801 = vmatpush.msra.mxu0 0.0
        %802 = vmatpush.msra.mxu0 %v782
        %803 = vmatpush.msra.mxu0 %v781
        %804 = vmatpush.msra.mxu0 %v780
        %805 = vmatpush.msra.mxu0 %v779
        %806 = vmatpush.msra.mxu0 %v778
        %807 = vmatpush.msra.mxu0 %v777
        %808 = vmatpush.msra.mxu0 %v776
        %809 = vmatpush.msra.mxu0 %v775
        %810 = vmatmul.f32.gmra.mxu0 %v789
        %v811 = vpop.f32.mrf.mxu0
        %v812 = vadd.f32 %v785, %v811
        %813 = vmatmul.f32.gmra.mxu0 %v792
        %v814 = vpop.f32.mrf.mxu0
        %v815 = vadd.f32 %v785, %v814
        %816 = vdwg.mxu0
        %v817 = vmax.f32 %v812, 0.0
        %v818 = vmax.f32 %v815, 0.0
        %819 = vst.msk [vmem:[#allocation2 + $0x1] sm:$0xff] %vm787, %v817
        %820 = vst.msk [vmem:[#allocation2 + $0x9] sm:$0xff] %vm787, %v818
        %v821 = vld [vmem:[#allocation2] sm:$0xff]
        %v822 = vld [vmem:[#allocation2 + $0x8] sm:$0xff]
        %v823 = vld [vmem:[#allocation10] sm:$0xff]
        %v824 = vld [vmem:[#allocation10 + $0x8] sm:$0xff]
        %v825 = vld [vmem:[#allocation10 + $0x10] sm:$0xff]
        %v826 = vld [vmem:[#allocation10 + $0x18] sm:$0xff]
        %v827 = vld [vmem:[#allocation10 + $0x20] sm:$0xff]
        %v828 = vld [vmem:[#allocation10 + $0x28] sm:$0xff]
        %v829 = vld [vmem:[#allocation10 + $0x30] sm:$0xff]
        %v830 = vld [vmem:[#allocation10 + $0x38] sm:$0xff]
        %v831 = vld [vmem:[#allocation2 + $0x1] sm:$0xff]
        %v832 = vld [vmem:[#allocation2 + $0x9] sm:$0xff]
        %s833 = scalar_lea.vmem [#allocation10], 64
        %v834 = vld [vmem:[%s833] sm:$0xff]
        %v835 = vld [vmem:[%s833 + $0x8] sm:$0xff]
        %v836 = vld [vmem:[%s833 + $0x10] sm:$0xff]
        %v837 = vld [vmem:[%s833 + $0x18] sm:$0xff]
        %v838 = vld [vmem:[%s833 + $0x20] sm:$0xff]
        %v839 = vld [vmem:[%s833 + $0x28] sm:$0xff]
        %v840 = vld [vmem:[%s833 + $0x30] sm:$0xff]
        %v841 = vld [vmem:[%s833 + $0x38] sm:$0xff]
        %v843 = vsel %vm787, %v831, 0
        %v846 = vsel %vm787, %v832, 0
        %848 = vmatpush.msra.mxu0 0.0
        %849 = vmatpush.msra.mxu0 0.0
        %850 = vmatpush.msra.mxu0 0.0
        %851 = vmatpush.msra.mxu0 0.0
        %852 = vmatpush.msra.mxu0 0.0
        %853 = vmatpush.msra.mxu0 0.0
        %854 = vmatpush.msra.mxu0 0.0
        %855 = vmatpush.msra.mxu0 0.0
        %856 = vmatpush.msra.mxu0 %v841
        %857 = vmatpush.msra.mxu0 %v840
        %858 = vmatpush.msra.mxu0 %v839
        %859 = vmatpush.msra.mxu0 %v838
        %860 = vmatpush.msra.mxu0 %v837
        %861 = vmatpush.msra.mxu0 %v836
        %862 = vmatpush.msra.mxu0 %v835
        %863 = vmatpush.msra.mxu0 %v834
        %864 = vmatmul.f32.gmra.mxu0 %v843
        %v865 = vpop.f32.mrf.mxu0
        %v866 = vadd.f32 0.0, %v865
        %867 = vmatmul.f32.gmra.mxu0 %v846
        %v868 = vpop.f32.mrf.mxu0
        %v869 = vadd.f32 0.0, %v868
        %870 = vdwg.mxu0
        %v872 = vsel %vm787, %v821, 0
        %v875 = vsel %vm787, %v822, 0
        %877 = vmatpush.msra.mxu0 0.0
        %878 = vmatpush.msra.mxu0 0.0
        %879 = vmatpush.msra.mxu0 0.0
        %880 = vmatpush.msra.mxu0 0.0
        %881 = vmatpush.msra.mxu0 0.0
        %882 = vmatpush.msra.mxu0 0.0
        %883 = vmatpush.msra.mxu0 0.0
        %884 = vmatpush.msra.mxu0 0.0
        %885 = vmatpush.msra.mxu0 %v830
        %886 = vmatpush.msra.mxu0 %v829
        %887 = vmatpush.msra.mxu0 %v828
        %888 = vmatpush.msra.mxu0 %v827
        %889 = vmatpush.msra.mxu0 %v826
        %890 = vmatpush.msra.mxu0 %v825
        %891 = vmatpush.msra.mxu0 %v824
        %892 = vmatpush.msra.mxu0 %v823
        %893 = vmatmul.f32.gmra.mxu0 %v872
        %v894 = vpop.f32.mrf.mxu0
        %v895 = vadd.f32 %v866, %v894
        %896 = vmatmul.f32.gmra.mxu0 %v875
        %v897 = vpop.f32.mrf.mxu0
        %v898 = vadd.f32 %v869, %v897
        %899 = vdwg.mxu0
        %v900 = vld [vmem:[#allocation2 + $0x2] sm:$0xff]
        %v901 = vld [vmem:[#allocation2 + $0xa] sm:$0xff]
        %s902 = scalar_lea.vmem [#allocation10], 128
        %v903 = vld [vmem:[%s902] sm:$0xff]
        %v904 = vld [vmem:[%s902 + $0x8] sm:$0xff]
        %v905 = vld [vmem:[%s902 + $0x10] sm:$0xff]
        %v906 = vld [vmem:[%s902 + $0x18] sm:$0xff]
        %v907 = vld [vmem:[%s902 + $0x20] sm:$0xff]
        %v908 = vld [vmem:[%s902 + $0x28] sm:$0xff]
        %v909 = vld [vmem:[%s902 + $0x30] sm:$0xff]
        %v910 = vld [vmem:[%s902 + $0x38] sm:$0xff]
        %v912 = vsel %vm787, %v900, 0
        %v915 = vsel %vm787, %v901, 0
        %917 = vmatpush.msra.mxu0 0.0
        %918 = vmatpush.msra.mxu0 0.0
        %919 = vmatpush.msra.mxu0 0.0
        %920 = vmatpush.msra.mxu0 0.0
        %921 = vmatpush.msra.mxu0 0.0
        %922 = vmatpush.msra.mxu0 0.0
        %923 = vmatpush.msra.mxu0 0.0
        %924 = vmatpush.msra.mxu0 0.0
        %925 = vmatpush.msra.mxu0 %v910
        %926 = vmatpush.msra.mxu0 %v909
        %927 = vmatpush.msra.mxu0 %v908
        %928 = vmatpush.msra.mxu0 %v907
        %929 = vmatpush.msra.mxu0 %v906
        %930 = vmatpush.msra.mxu0 %v905
        %931 = vmatpush.msra.mxu0 %v904
        %932 = vmatpush.msra.mxu0 %v903
        %933 = vmatmul.f32.gmra.mxu0 %v912
        %v934 = vpop.f32.mrf.mxu0
        %v935 = vadd.f32 0.0, %v934
        %936 = vmatmul.f32.gmra.mxu0 %v915
        %v937 = vpop.f32.mrf.mxu0
        %v938 = vadd.f32 0.0, %v937
        %939 = vdwg.mxu0
        %v940 = vadd.f32 %v895, %v935
        %v941 = vadd.f32 %v898, %v938
        %v942 = vld [vmem:[%s6] sm:$0x1]
        %v944 = vperm.slane %v942, 0
        %v946 = vadd.f32 %v940, %v944
        %v947 = vadd.f32 %v941, %v944
        %v948 = vmax.f32 %v946, 0.0
        %v949 = vmax.f32 %v947, 0.0
        %950 = vst.msk [vmem:[#allocation3 + $0x1] sm:$0xff] %vm787, %v948
        %951 = vst.msk [vmem:[#allocation3 + $0x9] sm:$0xff] %vm787, %v949
        %v952 = vld [vmem:[#allocation3] sm:$0xff]
        %v953 = vld [vmem:[#allocation3 + $0x8] sm:$0xff]
        %v954 = vld [vmem:[#allocation12] sm:$0xff]
        %v955 = vld [vmem:[#allocation12 + $0x8] sm:$0xff]
        %v956 = vld [vmem:[#allocation12 + $0x10] sm:$0xff]
        %v957 = vld [vmem:[#allocation12 + $0x18] sm:$0xff]
        %v958 = vld [vmem:[#allocation12 + $0x20] sm:$0xff]
        %v959 = vld [vmem:[#allocation12 + $0x28] sm:$0xff]
        %v960 = vld [vmem:[#allocation12 + $0x30] sm:$0xff]
        %v961 = vld [vmem:[#allocation12 + $0x38] sm:$0xff]
        %v962 = vld [vmem:[#allocation3 + $0x1] sm:$0xff]
        %v963 = vld [vmem:[#allocation3 + $0x9] sm:$0xff]
        %s964 = scalar_lea.vmem [#allocation12], 64
        %v965 = vld [vmem:[%s964] sm:$0xff]
        %v966 = vld [vmem:[%s964 + $0x8] sm:$0xff]
        %v967 = vld [vmem:[%s964 + $0x10] sm:$0xff]
        %v968 = vld [vmem:[%s964 + $0x18] sm:$0xff]
        %v969 = vld [vmem:[%s964 + $0x20] sm:$0xff]
        %v970 = vld [vmem:[%s964 + $0x28] sm:$0xff]
        %v971 = vld [vmem:[%s964 + $0x30] sm:$0xff]
        %v972 = vld [vmem:[%s964 + $0x38] sm:$0xff]
        %v974 = vsel %vm787, %v962, 0
        %v977 = vsel %vm787, %v963, 0
        %979 = vmatpush.msra.mxu0 0.0
        %980 = vmatpush.msra.mxu0 0.0
        %981 = vmatpush.msra.mxu0 0.0
        %982 = vmatpush.msra.mxu0 0.0
        %983 = vmatpush.msra.mxu0 0.0
        %984 = vmatpush.msra.mxu0 0.0
        %985 = vmatpush.msra.mxu0 0.0
        %986 = vmatpush.msra.mxu0 0.0
        %987 = vmatpush.msra.mxu0 %v972
        %988 = vmatpush.msra.mxu0 %v971
        %989 = vmatpush.msra.mxu0 %v970
        %990 = vmatpush.msra.mxu0 %v969
        %991 = vmatpush.msra.mxu0 %v968
        %992 = vmatpush.msra.mxu0 %v967
        %993 = vmatpush.msra.mxu0 %v966
        %994 = vmatpush.msra.mxu0 %v965
        %995 = vmatmul.f32.gmra.mxu0 %v974
        %v996 = vpop.f32.mrf.mxu0
        %v997 = vadd.f32 0.0, %v996
        %998 = vmatmul.f32.gmra.mxu0 %v977
        %v999 = vpop.f32.mrf.mxu0
        %v1000 = vadd.f32 0.0, %v999
        %1001 = vdwg.mxu0
        %v1003 = vsel %vm787, %v952, 0
        %v1006 = vsel %vm787, %v953, 0
        %1008 = vmatpush.msra.mxu0 0.0
        %1009 = vmatpush.msra.mxu0 0.0
        %1010 = vmatpush.msra.mxu0 0.0
        %1011 = vmatpush.msra.mxu0 0.0
        %1012 = vmatpush.msra.mxu0 0.0
        %1013 = vmatpush.msra.mxu0 0.0
        %1014 = vmatpush.msra.mxu0 0.0
        %1015 = vmatpush.msra.mxu0 0.0
        %1016 = vmatpush.msra.mxu0 %v961
        %1017 = vmatpush.msra.mxu0 %v960
        %1018 = vmatpush.msra.mxu0 %v959
        %1019 = vmatpush.msra.mxu0 %v958
        %1020 = vmatpush.msra.mxu0 %v957
        %1021 = vmatpush.msra.mxu0 %v956
        %1022 = vmatpush.msra.mxu0 %v955
        %1023 = vmatpush.msra.mxu0 %v954
        %1024 = vmatmul.f32.gmra.mxu0 %v1003
        %v1025 = vpop.f32.mrf.mxu0
        %v1026 = vadd.f32 %v997, %v1025
        %1027 = vmatmul.f32.gmra.mxu0 %v1006
        %v1028 = vpop.f32.mrf.mxu0
        %v1029 = vadd.f32 %v1000, %v1028
        %1030 = vdwg.mxu0
        %v1031 = vld [vmem:[#allocation3 + $0x2] sm:$0xff]
        %v1032 = vld [vmem:[#allocation3 + $0xa] sm:$0xff]
        %s1033 = scalar_lea.vmem [#allocation12], 128
        %v1034 = vld [vmem:[%s1033] sm:$0xff]
        %v1035 = vld [vmem:[%s1033 + $0x8] sm:$0xff]
        %v1036 = vld [vmem:[%s1033 + $0x10] sm:$0xff]
        %v1037 = vld [vmem:[%s1033 + $0x18] sm:$0xff]
        %v1038 = vld [vmem:[%s1033 + $0x20] sm:$0xff]
        %v1039 = vld [vmem:[%s1033 + $0x28] sm:$0xff]
        %v1040 = vld [vmem:[%s1033 + $0x30] sm:$0xff]
        %v1041 = vld [vmem:[%s1033 + $0x38] sm:$0xff]
        %v1043 = vsel %vm787, %v1031, 0
        %v1046 = vsel %vm787, %v1032, 0
        %1048 = vmatpush.msra.mxu0 0.0
        %1049 = vmatpush.msra.mxu0 0.0
        %1050 = vmatpush.msra.mxu0 0.0
        %1051 = vmatpush.msra.mxu0 0.0
        %1052 = vmatpush.msra.mxu0 0.0
        %1053 = vmatpush.msra.mxu0 0.0
        %1054 = vmatpush.msra.mxu0 0.0
        %1055 = vmatpush.msra.mxu0 0.0
        %1056 = vmatpush.msra.mxu0 %v1041
        %1057 = vmatpush.msra.mxu0 %v1040
        %1058 = vmatpush.msra.mxu0 %v1039
        %1059 = vmatpush.msra.mxu0 %v1038
        %1060 = vmatpush.msra.mxu0 %v1037
        %1061 = vmatpush.msra.mxu0 %v1036
        %1062 = vmatpush.msra.mxu0 %v1035
        %1063 = vmatpush.msra.mxu0 %v1034
        %1064 = vmatmul.f32.gmra.mxu0 %v1043
        %v1065 = vpop.f32.mrf.mxu0
        %v1066 = vadd.f32 0.0, %v1065
        %1067 = vmatmul.f32.gmra.mxu0 %v1046
        %v1068 = vpop.f32.mrf.mxu0
        %v1069 = vadd.f32 0.0, %v1068
        %1070 = vdwg.mxu0
        %v1071 = vadd.f32 %v1026, %v1066
        %v1072 = vadd.f32 %v1029, %v1069
        %v1073 = vld [vmem:[#allocation13] sm:$0x1]
        %v1075 = vperm.slane %v1073, 0
        %v1077 = vadd.f32 %v1071, %v1075
        %v1078 = vadd.f32 %v1072, %v1075
        %v1079 = vmax.f32 %v1077, 0.0
        %v1080 = vmax.f32 %v1078, 0.0
        %1081 = vst.msk [vmem:[#allocation2 + $0x1] sm:$0xff] %vm787, %v1079
        %1082 = vst.msk [vmem:[#allocation2 + $0x9] sm:$0xff] %vm787, %v1080
        %v1083 = vld [vmem:[#allocation2] sm:$0xff]
        %v1084 = vld [vmem:[#allocation2 + $0x8] sm:$0xff]
        %v1085 = vld [vmem:[%s9] sm:$0xff]
        %v1086 = vld [vmem:[%s9 + $0x8] sm:$0xff]
        %v1087 = vld [vmem:[%s9 + $0x10] sm:$0xff]
        %v1088 = vld [vmem:[%s9 + $0x18] sm:$0xff]
        %v1089 = vld [vmem:[%s9 + $0x20] sm:$0xff]
        %v1090 = vld [vmem:[%s9 + $0x28] sm:$0xff]
        %v1091 = vld [vmem:[%s9 + $0x30] sm:$0xff]
        %v1092 = vld [vmem:[%s9 + $0x38] sm:$0xff]
        %v1093 = vld [vmem:[%s9 + $0x40] sm:$0xff]
        %v1094 = vld [vmem:[%s9 + $0x48] sm:$0xff]
        %v1095 = vld [vmem:[%s9 + $0x50] sm:$0xff]
        %v1096 = vld [vmem:[%s9 + $0x58] sm:$0xff]
        %v1097 = vld [vmem:[%s9 + $0x60] sm:$0xff]
        %v1098 = vld [vmem:[%s9 + $0x68] sm:$0xff]
        %v1099 = vld [vmem:[%s9 + $0x70] sm:$0xff]
        %v1100 = vld [vmem:[%s9 + $0x78] sm:$0xff]
        %v1101 = vld [vmem:[#allocation2 + $0x1] sm:$0xff]
        %v1102 = vld [vmem:[#allocation2 + $0x9] sm:$0xff]
        %s1103 = scalar_lea.vmem %s9, 128
        %v1104 = vld [vmem:[%s1103] sm:$0xff]
        %v1105 = vld [vmem:[%s1103 + $0x8] sm:$0xff]
        %v1106 = vld [vmem:[%s1103 + $0x10] sm:$0xff]
        %v1107 = vld [vmem:[%s1103 + $0x18] sm:$0xff]
        %v1108 = vld [vmem:[%s1103 + $0x20] sm:$0xff]
        %v1109 = vld [vmem:[%s1103 + $0x28] sm:$0xff]
        %v1110 = vld [vmem:[%s1103 + $0x30] sm:$0xff]
        %v1111 = vld [vmem:[%s1103 + $0x38] sm:$0xff]
        %v1112 = vld [vmem:[%s1103 + $0x40] sm:$0xff]
        %v1113 = vld [vmem:[%s1103 + $0x48] sm:$0xff]
        %v1114 = vld [vmem:[%s1103 + $0x50] sm:$0xff]
        %v1115 = vld [vmem:[%s1103 + $0x58] sm:$0xff]
        %v1116 = vld [vmem:[%s1103 + $0x60] sm:$0xff]
        %v1117 = vld [vmem:[%s1103 + $0x68] sm:$0xff]
        %v1118 = vld [vmem:[%s1103 + $0x70] sm:$0xff]
        %v1119 = vld [vmem:[%s1103 + $0x78] sm:$0xff]
        %v1121 = vsel %vm787, %v1101, 0
        %v1124 = vsel %vm787, %v1102, 0
        %1126 = vmatpush.msra.mxu0 0.0
        %1127 = vmatpush.msra.mxu0 0.0
        %1128 = vmatpush.msra.mxu0 0.0
        %1129 = vmatpush.msra.mxu0 0.0
        %1130 = vmatpush.msra.mxu0 0.0
        %1131 = vmatpush.msra.mxu0 0.0
        %1132 = vmatpush.msra.mxu0 0.0
        %1133 = vmatpush.msra.mxu0 0.0
        %1134 = vmatpush.msra.mxu0 %v1118
        %1135 = vmatpush.msra.mxu0 %v1116
        %1136 = vmatpush.msra.mxu0 %v1114
        %1137 = vmatpush.msra.mxu0 %v1112
        %1138 = vmatpush.msra.mxu0 %v1110
        %1139 = vmatpush.msra.mxu0 %v1108
        %1140 = vmatpush.msra.mxu0 %v1106
        %1141 = vmatpush.msra.mxu0 %v1104
        %1142 = vmatmul.f32.gmra.mxu0 %v1121
        %v1143 = vpop.f32.mrf.mxu0
        %v1144 = vadd.f32 0.0, %v1143
        %1145 = vmatmul.f32.gmra.mxu0 %v1124
        %v1146 = vpop.f32.mrf.mxu0
        %v1147 = vadd.f32 0.0, %v1146
        %1148 = vdwg.mxu0
        %1149 = vmatpush.msra.mxu0 0.0
        %1150 = vmatpush.msra.mxu0 0.0
        %1151 = vmatpush.msra.mxu0 0.0
        %1152 = vmatpush.msra.mxu0 0.0
        %1153 = vmatpush.msra.mxu0 0.0
        %1154 = vmatpush.msra.mxu0 0.0
        %1155 = vmatpush.msra.mxu0 0.0
        %1156 = vmatpush.msra.mxu0 0.0
        %1157 = vmatpush.msra.mxu0 %v1119
        %1158 = vmatpush.msra.mxu0 %v1117
        %1159 = vmatpush.msra.mxu0 %v1115
        %1160 = vmatpush.msra.mxu0 %v1113
        %1161 = vmatpush.msra.mxu0 %v1111
        %1162 = vmatpush.msra.mxu0 %v1109
        %1163 = vmatpush.msra.mxu0 %v1107
        %1164 = vmatpush.msra.mxu0 %v1105
        %1165 = vmatmul.f32.gmra.mxu0 %v1121
        %v1166 = vpop.f32.mrf.mxu0
        %v1167 = vadd.f32 0.0, %v1166
        %1168 = vmatmul.f32.gmra.mxu0 %v1124
        %v1169 = vpop.f32.mrf.mxu0
        %v1170 = vadd.f32 0.0, %v1169
        %1171 = vdwg.mxu0
        %v1173 = vsel %vm787, %v1083, 0
        %v1176 = vsel %vm787, %v1084, 0
        %1178 = vmatpush.msra.mxu0 0.0
        %1179 = vmatpush.msra.mxu0 0.0
        %1180 = vmatpush.msra.mxu0 0.0
        %1181 = vmatpush.msra.mxu0 0.0
        %1182 = vmatpush.msra.mxu0 0.0
        %1183 = vmatpush.msra.mxu0 0.0
        %1184 = vmatpush.msra.mxu0 0.0
        %1185 = vmatpush.msra.mxu0 0.0
        %1186 = vmatpush.msra.mxu0 %v1099
        %1187 = vmatpush.msra.mxu0 %v1097
        %1188 = vmatpush.msra.mxu0 %v1095
        %1189 = vmatpush.msra.mxu0 %v1093
        %1190 = vmatpush.msra.mxu0 %v1091
        %1191 = vmatpush.msra.mxu0 %v1089
        %1192 = vmatpush.msra.mxu0 %v1087
        %1193 = vmatpush.msra.mxu0 %v1085
        %1194 = vmatmul.f32.gmra.mxu0 %v1173
        %v1195 = vpop.f32.mrf.mxu0
        %v1196 = vadd.f32 %v1144, %v1195
        %1197 = vmatmul.f32.gmra.mxu0 %v1176
        %v1198 = vpop.f32.mrf.mxu0
        %v1199 = vadd.f32 %v1147, %v1198
        %1200 = vdwg.mxu0
        %1201 = vmatpush.msra.mxu0 0.0
        %1202 = vmatpush.msra.mxu0 0.0
        %1203 = vmatpush.msra.mxu0 0.0
        %1204 = vmatpush.msra.mxu0 0.0
        %1205 = vmatpush.msra.mxu0 0.0
        %1206 = vmatpush.msra.mxu0 0.0
        %1207 = vmatpush.msra.mxu0 0.0
        %1208 = vmatpush.msra.mxu0 0.0
        %1209 = vmatpush.msra.mxu0 %v1100
        %1210 = vmatpush.msra.mxu0 %v1098
        %1211 = vmatpush.msra.mxu0 %v1096
        %1212 = vmatpush.msra.mxu0 %v1094
        %1213 = vmatpush.msra.mxu0 %v1092
        %1214 = vmatpush.msra.mxu0 %v1090
        %1215 = vmatpush.msra.mxu0 %v1088
        %1216 = vmatpush.msra.mxu0 %v1086
        %1217 = vmatmul.f32.gmra.mxu0 %v1173
        %v1218 = vpop.f32.mrf.mxu0
        %v1219 = vadd.f32 %v1167, %v1218
        %1220 = vmatmul.f32.gmra.mxu0 %v1176
        %v1221 = vpop.f32.mrf.mxu0
        %v1222 = vadd.f32 %v1170, %v1221
        %1223 = vdwg.mxu0
        %v1224 = vld [vmem:[#allocation2 + $0x2] sm:$0xff]
        %v1225 = vld [vmem:[#allocation2 + $0xa] sm:$0xff]
        %s1226 = scalar_lea.vmem %s9, 256
        %v1227 = vld [vmem:[%s1226] sm:$0xff]
        %v1228 = vld [vmem:[%s1226 + $0x8] sm:$0xff]
        %v1229 = vld [vmem:[%s1226 + $0x10] sm:$0xff]
        %v1230 = vld [vmem:[%s1226 + $0x18] sm:$0xff]
        %v1231 = vld [vmem:[%s1226 + $0x20] sm:$0xff]
        %v1232 = vld [vmem:[%s1226 + $0x28] sm:$0xff]
        %v1233 = vld [vmem:[%s1226 + $0x30] sm:$0xff]
        %v1234 = vld [vmem:[%s1226 + $0x38] sm:$0xff]
        %v1235 = vld [vmem:[%s1226 + $0x40] sm:$0xff]
        %v1236 = vld [vmem:[%s1226 + $0x48] sm:$0xff]
        %v1237 = vld [vmem:[%s1226 + $0x50] sm:$0xff]
        %v1238 = vld [vmem:[%s1226 + $0x58] sm:$0xff]
        %v1239 = vld [vmem:[%s1226 + $0x60] sm:$0xff]
        %v1240 = vld [vmem:[%s1226 + $0x68] sm:$0xff]
        %v1241 = vld [vmem:[%s1226 + $0x70] sm:$0xff]
        %v1242 = vld [vmem:[%s1226 + $0x78] sm:$0xff]
        %v1244 = vsel %vm787, %v1224, 0
        %v1247 = vsel %vm787, %v1225, 0
        %1249 = vmatpush.msra.mxu0 0.0
        %1250 = vmatpush.msra.mxu0 0.0
        %1251 = vmatpush.msra.mxu0 0.0
        %1252 = vmatpush.msra.mxu0 0.0
        %1253 = vmatpush.msra.mxu0 0.0
        %1254 = vmatpush.msra.mxu0 0.0
        %1255 = vmatpush.msra.mxu0 0.0
        %1256 = vmatpush.msra.mxu0 0.0
        %1257 = vmatpush.msra.mxu0 %v1241
        %1258 = vmatpush.msra.mxu0 %v1239
        %1259 = vmatpush.msra.mxu0 %v1237
        %1260 = vmatpush.msra.mxu0 %v1235
        %1261 = vmatpush.msra.mxu0 %v1233
        %1262 = vmatpush.msra.mxu0 %v1231
        %1263 = vmatpush.msra.mxu0 %v1229
        %1264 = vmatpush.msra.mxu0 %v1227
        %1265 = vmatmul.f32.gmra.mxu0 %v1244
        %v1266 = vpop.f32.mrf.mxu0
        %v1267 = vadd.f32 0.0, %v1266
        %1268 = vmatmul.f32.gmra.mxu0 %v1247
        %v1269 = vpop.f32.mrf.mxu0
        %v1270 = vadd.f32 0.0, %v1269
        %1271 = vdwg.mxu0
        %1272 = vmatpush.msra.mxu0 0.0
        %1273 = vmatpush.msra.mxu0 0.0
        %1274 = vmatpush.msra.mxu0 0.0
        %1275 = vmatpush.msra.mxu0 0.0
        %1276 = vmatpush.msra.mxu0 0.0
        %1277 = vmatpush.msra.mxu0 0.0
        %1278 = vmatpush.msra.mxu0 0.0
        %1279 = vmatpush.msra.mxu0 0.0
        %1280 = vmatpush.msra.mxu0 %v1242
        %1281 = vmatpush.msra.mxu0 %v1240
        %1282 = vmatpush.msra.mxu0 %v1238
        %1283 = vmatpush.msra.mxu0 %v1236
        %1284 = vmatpush.msra.mxu0 %v1234
        %1285 = vmatpush.msra.mxu0 %v1232
        %1286 = vmatpush.msra.mxu0 %v1230
        %1287 = vmatpush.msra.mxu0 %v1228
        %1288 = vmatmul.f32.gmra.mxu0 %v1244
        %v1289 = vpop.f32.mrf.mxu0
        %v1290 = vadd.f32 0.0, %v1289
        %1291 = vmatmul.f32.gmra.mxu0 %v1247
        %v1292 = vpop.f32.mrf.mxu0
        %v1293 = vadd.f32 0.0, %v1292
        %1294 = vdwg.mxu0
        %v1295 = vadd.f32 %v1196, %v1267
        %v1296 = vadd.f32 %v1219, %v1290
        %v1297 = vadd.f32 %v1199, %v1270
        %v1298 = vadd.f32 %v1222, %v1293
        %v1299 = vld [vmem:[%s10] sm:$0x3]
        %v1301 = vperm.slane %v1299, 0
        %v1302 = vperm.slane %v1299, 1
        %v1305 = vadd.f32 %v1295, %v1301
        %v1306 = vadd.f32 %v1296, %v1302
        %v1307 = vadd.f32 %v1297, %v1301
        %v1308 = vadd.f32 %v1298, %v1302
        %v1309 = vmax.f32 %v1305, 0.0
        %v1310 = vmax.f32 %v1306, 0.0
        %v1311 = vmax.f32 %v1307, 0.0
        %v1312 = vmax.f32 %v1308, 0.0
        %v1313 = vld [vmem:[#allocation7] sm:$0xff]
        %v1314 = vld [vmem:[#allocation7 + $0x8] sm:$0xff]
        %v1315 = vld [vmem:[#allocation7 + $0x10] sm:$0xff]
        %v1316 = vld [vmem:[#allocation7 + $0x18] sm:$0xff]
        %v1317 = vld [vmem:[#allocation7 + $0x20] sm:$0xff]
        %v1318 = vld [vmem:[#allocation7 + $0x28] sm:$0xff]
        %v1319 = vld [vmem:[#allocation7 + $0x30] sm:$0xff]
        %v1320 = vld [vmem:[#allocation7 + $0x38] sm:$0xff]
        %v1321 = vld [vmem:[#allocation7 + $0x40] sm:$0xff]
        %v1322 = vld [vmem:[#allocation7 + $0x48] sm:$0xff]
        %v1323 = vld [vmem:[#allocation7 + $0x50] sm:$0xff]
        %v1324 = vld [vmem:[#allocation7 + $0x58] sm:$0xff]
        %v1325 = vld [vmem:[#allocation7 + $0x60] sm:$0xff]
        %v1326 = vld [vmem:[#allocation7 + $0x68] sm:$0xff]
        %v1327 = vld [vmem:[#allocation7 + $0x70] sm:$0xff]
        %v1328 = vld [vmem:[#allocation7 + $0x78] sm:$0xff]
        %v1329 = vld [vmem:[%s2] sm:$0x3]
        %v1331 = vperm.slane %v1329, 0
        %v1332 = vperm.slane %v1329, 1
        %1335 = vmatpush.msra.mxu0 0.0
        %1336 = vmatpush.msra.mxu0 0.0
        %1337 = vmatpush.msra.mxu0 0.0
        %1338 = vmatpush.msra.mxu0 0.0
        %1339 = vmatpush.msra.mxu0 0.0
        %1340 = vmatpush.msra.mxu0 0.0
        %1341 = vmatpush.msra.mxu0 0.0
        %1342 = vmatpush.msra.mxu0 0.0
        %1343 = vmatpush.msra.mxu0 %v1327
        %1344 = vmatpush.msra.mxu0 %v1325
        %1345 = vmatpush.msra.mxu0 %v1323
        %1346 = vmatpush.msra.mxu0 %v1321
        %1347 = vmatpush.msra.mxu0 %v1319
        %1348 = vmatpush.msra.mxu0 %v1317
        %1349 = vmatpush.msra.mxu0 %v1315
        %1350 = vmatpush.msra.mxu0 %v1313
        %1351 = vmatmul.f32.gmra.mxu0 %v789
        %v1352 = vpop.f32.mrf.mxu0
        %v1353 = vadd.f32 %v1331, %v1352
        %1354 = vmatmul.f32.gmra.mxu0 %v792
        %v1355 = vpop.f32.mrf.mxu0
        %v1356 = vadd.f32 %v1331, %v1355
        %1357 = vdwg.mxu0
        %1358 = vmatpush.msra.mxu0 0.0
        %1359 = vmatpush.msra.mxu0 0.0
        %1360 = vmatpush.msra.mxu0 0.0
        %1361 = vmatpush.msra.mxu0 0.0
        %1362 = vmatpush.msra.mxu0 0.0
        %1363 = vmatpush.msra.mxu0 0.0
        %1364 = vmatpush.msra.mxu0 0.0
        %1365 = vmatpush.msra.mxu0 0.0
        %1366 = vmatpush.msra.mxu0 %v1328
        %1367 = vmatpush.msra.mxu0 %v1326
        %1368 = vmatpush.msra.mxu0 %v1324
        %1369 = vmatpush.msra.mxu0 %v1322
        %1370 = vmatpush.msra.mxu0 %v1320
        %1371 = vmatpush.msra.mxu0 %v1318
        %1372 = vmatpush.msra.mxu0 %v1316
        %1373 = vmatpush.msra.mxu0 %v1314
        %1374 = vmatmul.f32.gmra.mxu0 %v789
        %v1375 = vpop.f32.mrf.mxu0
        %v1376 = vadd.f32 %v1332, %v1375
        %1377 = vmatmul.f32.gmra.mxu0 %v792
        %v1378 = vpop.f32.mrf.mxu0
        %v1379 = vadd.f32 %v1332, %v1378
        %1380 = vdwg.mxu0
        %v1381 = vmul.f32 %v1309, 0.0625
        %v1382 = vmul.f32 %v1310, 0.0625
        %v1383 = vmul.f32 %v1311, 0.0625
        %v1384 = vmul.f32 %v1312, 0.0625
        %v1385 = vadd.f32 %v1353, %v1381
        %v1386 = vadd.f32 %v1376, %v1382
        %v1387 = vadd.f32 %v1356, %v1383
        %v1388 = vadd.f32 %v1379, %v1384
        %v1389 = vld [vmem:[%s11] sm:$0xff]
        %v1390 = vld [vmem:[%s11 + $0x8] sm:$0xff]
        %v1391 = vld [vmem:[%s11 + $0x10] sm:$0xff]
        %v1392 = vld [vmem:[%s11 + $0x18] sm:$0xff]
        %v1393 = vld [vmem:[%s11 + $0x20] sm:$0xff]
        %v1394 = vld [vmem:[%s11 + $0x28] sm:$0xff]
        %v1395 = vld [vmem:[%s11 + $0x30] sm:$0xff]
        %v1396 = vld [vmem:[%s11 + $0x38] sm:$0xff]
        %v1397 = vld [vmem:[%s11 + $0x40] sm:$0xff]
        %v1398 = vld [vmem:[%s11 + $0x48] sm:$0xff]
        %v1399 = vld [vmem:[%s11 + $0x50] sm:$0xff]
        %v1400 = vld [vmem:[%s11 + $0x58] sm:$0xff]
        %v1401 = vld [vmem:[%s11 + $0x60] sm:$0xff]
        %v1402 = vld [vmem:[%s11 + $0x68] sm:$0xff]
        %v1403 = vld [vmem:[%s11 + $0x70] sm:$0xff]
        %v1404 = vld [vmem:[%s11 + $0x78] sm:$0xff]
        %v1405 = vld [vmem:[%s11 + $0x80] sm:$0xff]
        %v1406 = vld [vmem:[%s11 + $0x88] sm:$0xff]
        %v1407 = vld [vmem:[%s11 + $0x90] sm:$0xff]
        %v1408 = vld [vmem:[%s11 + $0x98] sm:$0xff]
        %v1409 = vld [vmem:[%s11 + $0xa0] sm:$0xff]
        %v1410 = vld [vmem:[%s11 + $0xa8] sm:$0xff]
        %v1411 = vld [vmem:[%s11 + $0xb0] sm:$0xff]
        %v1412 = vld [vmem:[%s11 + $0xb8] sm:$0xff]
        %v1413 = vld [vmem:[%s11 + $0xc0] sm:$0xff]
        %v1414 = vld [vmem:[%s11 + $0xc8] sm:$0xff]
        %v1415 = vld [vmem:[%s11 + $0xd0] sm:$0xff]
        %v1416 = vld [vmem:[%s11 + $0xd8] sm:$0xff]
        %v1417 = vld [vmem:[%s11 + $0xe0] sm:$0xff]
        %v1418 = vld [vmem:[%s11 + $0xe8] sm:$0xff]
        %v1419 = vld [vmem:[%s11 + $0xf0] sm:$0xff]
        %v1420 = vld [vmem:[%s11 + $0xf8] sm:$0xff]
        %v1421 = vld [vmem:[%s12] sm:$0x1]
        %v1423 = vperm.slane %v1421, 0
        %1425 = vmatpush.msra.mxu0 %v1404
        %1426 = vmatpush.msra.mxu0 %v1403
        %1427 = vmatpush.msra.mxu0 %v1402
        %1428 = vmatpush.msra.mxu0 %v1401
        %1429 = vmatpush.msra.mxu0 %v1400
        %1430 = vmatpush.msra.mxu0 %v1399
        %1431 = vmatpush.msra.mxu0 %v1398
        %1432 = vmatpush.msra.mxu0 %v1397
        %1433 = vmatpush.msra.mxu0 %v1396
        %1434 = vmatpush.msra.mxu0 %v1395
        %1435 = vmatpush.msra.mxu0 %v1394
        %1436 = vmatpush.msra.mxu0 %v1393
        %1437 = vmatpush.msra.mxu0 %v1392
        %1438 = vmatpush.msra.mxu0 %v1391
        %1439 = vmatpush.msra.mxu0 %v1390
        %1440 = vmatpush.msra.mxu0 %v1389
        %1441 = vmatmul.f32.gmra.mxu0 %v1385
        %v1442 = vpop.f32.mrf.mxu0
        %v1443 = vadd.f32 %v1423, %v1442
        %1444 = vmatmul.f32.gmra.mxu0 %v1387
        %v1445 = vpop.f32.mrf.mxu0
        %v1446 = vadd.f32 %v1423, %v1445
        %1447 = vdwg.mxu0
        %1448 = vmatpush.msra.mxu0 %v1420
        %1449 = vmatpush.msra.mxu0 %v1419
        %1450 = vmatpush.msra.mxu0 %v1418
        %1451 = vmatpush.msra.mxu0 %v1417
        %1452 = vmatpush.msra.mxu0 %v1416
        %1453 = vmatpush.msra.mxu0 %v1415
        %1454 = vmatpush.msra.mxu0 %v1414
        %1455 = vmatpush.msra.mxu0 %v1413
        %1456 = vmatpush.msra.mxu0 %v1412
        %1457 = vmatpush.msra.mxu0 %v1411
        %1458 = vmatpush.msra.mxu0 %v1410
        %1459 = vmatpush.msra.mxu0 %v1409
        %1460 = vmatpush.msra.mxu0 %v1408
        %1461 = vmatpush.msra.mxu0 %v1407
        %1462 = vmatpush.msra.mxu0 %v1406
        %1463 = vmatpush.msra.mxu0 %v1405
        %1464 = vmatmul.f32.gmra.mxu0 %v1386
        %v1465 = vpop.f32.mrf.mxu0
        %v1466 = vadd.f32 %v1443, %v1465
        %1467 = vmatmul.f32.gmra.mxu0 %v1388
        %v1468 = vpop.f32.mrf.mxu0
        %v1469 = vadd.f32 %v1446, %v1468
        %1470 = vdwg.mxu0
        %v1471 = vmax.f32 %v1466, 0.0
        %v1472 = vmax.f32 %v1469, 0.0
        %1473 = vst.msk [vmem:[#allocation2 + $0x1] sm:$0xff] %vm787, %v1471
        %1474 = vst.msk [vmem:[#allocation2 + $0x9] sm:$0xff] %vm787, %v1472
        %v1475 = vld [vmem:[#allocation2] sm:$0xff]
        %v1476 = vld [vmem:[#allocation2 + $0x8] sm:$0xff]
        %v1477 = vld [vmem:[#allocation15] sm:$0xff]
        %v1478 = vld [vmem:[#allocation15 + $0x8] sm:$0xff]
        %v1479 = vld [vmem:[#allocation15 + $0x10] sm:$0xff]
        %v1480 = vld [vmem:[#allocation15 + $0x18] sm:$0xff]
        %v1481 = vld [vmem:[#allocation15 + $0x20] sm:$0xff]
        %v1482 = vld [vmem:[#allocation15 + $0x28] sm:$0xff]
        %v1483 = vld [vmem:[#allocation15 + $0x30] sm:$0xff]
        %v1484 = vld [vmem:[#allocation15 + $0x38] sm:$0xff]
        %v1485 = vld [vmem:[#allocation2 + $0x1] sm:$0xff]
        %v1486 = vld [vmem:[#allocation2 + $0x9] sm:$0xff]
        %s1487 = scalar_lea.vmem [#allocation15], 64
        %v1488 = vld [vmem:[%s1487] sm:$0xff]
        %v1489 = vld [vmem:[%s1487 + $0x8] sm:$0xff]
        %v1490 = vld [vmem:[%s1487 + $0x10] sm:$0xff]
        %v1491 = vld [vmem:[%s1487 + $0x18] sm:$0xff]
        %v1492 = vld [vmem:[%s1487 + $0x20] sm:$0xff]
        %v1493 = vld [vmem:[%s1487 + $0x28] sm:$0xff]
        %v1494 = vld [vmem:[%s1487 + $0x30] sm:$0xff]
        %v1495 = vld [vmem:[%s1487 + $0x38] sm:$0xff]
        %v1497 = vsel %vm787, %v1485, 0
        %v1500 = vsel %vm787, %v1486, 0
        %1502 = vmatpush.msra.mxu0 0.0
        %1503 = vmatpush.msra.mxu0 0.0
        %1504 = vmatpush.msra.mxu0 0.0
        %1505 = vmatpush.msra.mxu0 0.0
        %1506 = vmatpush.msra.mxu0 0.0
        %1507 = vmatpush.msra.mxu0 0.0
        %1508 = vmatpush.msra.mxu0 0.0
        %1509 = vmatpush.msra.mxu0 0.0
        %1510 = vmatpush.msra.mxu0 %v1495
        %1511 = vmatpush.msra.mxu0 %v1494
        %1512 = vmatpush.msra.mxu0 %v1493
        %1513 = vmatpush.msra.mxu0 %v1492
        %1514 = vmatpush.msra.mxu0 %v1491
        %1515 = vmatpush.msra.mxu0 %v1490
        %1516 = vmatpush.msra.mxu0 %v1489
        %1517 = vmatpush.msra.mxu0 %v1488
        %1518 = vmatmul.f32.gmra.mxu0 %v1497
        %v1519 = vpop.f32.mrf.mxu0
        %v1520 = vadd.f32 0.0, %v1519
        %1521 = vmatmul.f32.gmra.mxu0 %v1500
        %v1522 = vpop.f32.mrf.mxu0
        %v1523 = vadd.f32 0.0, %v1522
        %1524 = vdwg.mxu0
        %v1526 = vsel %vm787, %v1475, 0
        %v1529 = vsel %vm787, %v1476, 0
        %1531 = vmatpush.msra.mxu0 0.0
        %1532 = vmatpush.msra.mxu0 0.0
        %1533 = vmatpush.msra.mxu0 0.0
        %1534 = vmatpush.msra.mxu0 0.0
        %1535 = vmatpush.msra.mxu0 0.0
        %1536 = vmatpush.msra.mxu0 0.0
        %1537 = vmatpush.msra.mxu0 0.0
        %1538 = vmatpush.msra.mxu0 0.0
        %1539 = vmatpush.msra.mxu0 %v1484
        %1540 = vmatpush.msra.mxu0 %v1483
        %1541 = vmatpush.msra.mxu0 %v1482
        %1542 = vmatpush.msra.mxu0 %v1481
        %1543 = vmatpush.msra.mxu0 %v1480
        %1544 = vmatpush.msra.mxu0 %v1479
        %1545 = vmatpush.msra.mxu0 %v1478
        %1546 = vmatpush.msra.mxu0 %v1477
        %1547 = vmatmul.f32.gmra.mxu0 %v1526
        %v1548 = vpop.f32.mrf.mxu0
        %v1549 = vadd.f32 %v1520, %v1548
        %1550 = vmatmul.f32.gmra.mxu0 %v1529
        %v1551 = vpop.f32.mrf.mxu0
        %v1552 = vadd.f32 %v1523, %v1551
        %1553 = vdwg.mxu0
        %v1554 = vld [vmem:[#allocation2 + $0x2] sm:$0xff]
        %v1555 = vld [vmem:[#allocation2 + $0xa] sm:$0xff]
        %s1556 = scalar_lea.vmem [#allocation15], 128
        %v1557 = vld [vmem:[%s1556] sm:$0xff]
        %v1558 = vld [vmem:[%s1556 + $0x8] sm:$0xff]
        %v1559 = vld [vmem:[%s1556 + $0x10] sm:$0xff]
        %v1560 = vld [vmem:[%s1556 + $0x18] sm:$0xff]
        %v1561 = vld [vmem:[%s1556 + $0x20] sm:$0xff]
        %v1562 = vld [vmem:[%s1556 + $0x28] sm:$0xff]
        %v1563 = vld [vmem:[%s1556 + $0x30] sm:$0xff]
        %v1564 = vld [vmem:[%s1556 + $0x38] sm:$0xff]
        %v1566 = vsel %vm787, %v1554, 0
        %v1569 = vsel %vm787, %v1555, 0
        %1571 = vmatpush.msra.mxu0 0.0
        %1572 = vmatpush.msra.mxu0 0.0
        %1573 = vmatpush.msra.mxu0 0.0
        %1574 = vmatpush.msra.mxu0 0.0
        %1575 = vmatpush.msra.mxu0 0.0
        %1576 = vmatpush.msra.mxu0 0.0
        %1577 = vmatpush.msra.mxu0 0.0
        %1578 = vmatpush.msra.mxu0 0.0
        %1579 = vmatpush.msra.mxu0 %v1564
        %1580 = vmatpush.msra.mxu0 %v1563
        %1581 = vmatpush.msra.mxu0 %v1562
        %1582 = vmatpush.msra.mxu0 %v1561
        %1583 = vmatpush.msra.mxu0 %v1560
        %1584 = vmatpush.msra.mxu0 %v1559
        %1585 = vmatpush.msra.mxu0 %v1558
        %1586 = vmatpush.msra.mxu0 %v1557
        %1587 = vmatmul.f32.gmra.mxu0 %v1566
        %v1588 = vpop.f32.mrf.mxu0
        %v1589 = vadd.f32 0.0, %v1588
        %1590 = vmatmul.f32.gmra.mxu0 %v1569
        %v1591 = vpop.f32.mrf.mxu0
        %v1592 = vadd.f32 0.0, %v1591
        %1593 = vdwg.mxu0
        %v1594 = vadd.f32 %v1549, %v1589
        %v1595 = vadd.f32 %v1552, %v1592
        %v1596 = vld [vmem:[#allocation16] sm:$0x1]
        %v1598 = vperm.slane %v1596, 0
        %v1600 = vadd.f32 %v1594, %v1598
        %v1601 = vadd.f32 %v1595, %v1598
        %v1602 = vmax.f32 %v1600, 0.0
        %v1603 = vmax.f32 %v1601, 0.0
        %1604 = vst.msk [vmem:[#allocation3 + $0x1] sm:$0xff] %vm787, %v1602
        %1605 = vst.msk [vmem:[#allocation3 + $0x9] sm:$0xff] %vm787, %v1603
        %v1606 = vld [vmem:[#allocation3] sm:$0xff]
        %v1607 = vld [vmem:[#allocation3 + $0x8] sm:$0xff]
        %v1608 = vld [vmem:[#allocation18] sm:$0xff]
        %v1609 = vld [vmem:[#allocation18 + $0x8] sm:$0xff]
        %v1610 = vld [vmem:[#allocation18 + $0x10] sm:$0xff]
        %v1611 = vld [vmem:[#allocation18 + $0x18] sm:$0xff]
        %v1612 = vld [vmem:[#allocation18 + $0x20] sm:$0xff]
        %v1613 = vld [vmem:[#allocation18 + $0x28] sm:$0xff]
        %v1614 = vld [vmem:[#allocation18 + $0x30] sm:$0xff]
        %v1615 = vld [vmem:[#allocation18 + $0x38] sm:$0xff]
        %v1616 = vld [vmem:[#allocation3 + $0x1] sm:$0xff]
        %v1617 = vld [vmem:[#allocation3 + $0x9] sm:$0xff]
        %s1618 = scalar_lea.vmem [#allocation18], 64
        %v1619 = vld [vmem:[%s1618] sm:$0xff]
        %v1620 = vld [vmem:[%s1618 + $0x8] sm:$0xff]
        %v1621 = vld [vmem:[%s1618 + $0x10] sm:$0xff]
        %v1622 = vld [vmem:[%s1618 + $0x18] sm:$0xff]
        %v1623 = vld [vmem:[%s1618 + $0x20] sm:$0xff]
        %v1624 = vld [vmem:[%s1618 + $0x28] sm:$0xff]
        %v1625 = vld [vmem:[%s1618 + $0x30] sm:$0xff]
        %v1626 = vld [vmem:[%s1618 + $0x38] sm:$0xff]
        %v1628 = vsel %vm787, %v1616, 0
        %v1631 = vsel %vm787, %v1617, 0
        %1633 = vmatpush.msra.mxu0 0.0
        %1634 = vmatpush.msra.mxu0 0.0
        %1635 = vmatpush.msra.mxu0 0.0
        %1636 = vmatpush.msra.mxu0 0.0
        %1637 = vmatpush.msra.mxu0 0.0
        %1638 = vmatpush.msra.mxu0 0.0
        %1639 = vmatpush.msra.mxu0 0.0
        %1640 = vmatpush.msra.mxu0 0.0
        %1641 = vmatpush.msra.mxu0 %v1626
        %1642 = vmatpush.msra.mxu0 %v1625
        %1643 = vmatpush.msra.mxu0 %v1624
        %1644 = vmatpush.msra.mxu0 %v1623
        %1645 = vmatpush.msra.mxu0 %v1622
        %1646 = vmatpush.msra.mxu0 %v1621
        %1647 = vmatpush.msra.mxu0 %v1620
        %1648 = vmatpush.msra.mxu0 %v1619
        %1649 = vmatmul.f32.gmra.mxu0 %v1628
        %v1650 = vpop.f32.mrf.mxu0
        %v1651 = vadd.f32 0.0, %v1650
        %1652 = vmatmul.f32.gmra.mxu0 %v1631
        %v1653 = vpop.f32.mrf.mxu0
        %v1654 = vadd.f32 0.0, %v1653
        %1655 = vdwg.mxu0
        %v1657 = vsel %vm787, %v1606, 0
        %v1660 = vsel %vm787, %v1607, 0
        %1662 = vmatpush.msra.mxu0 0.0
        %1663 = vmatpush.msra.mxu0 0.0
        %1664 = vmatpush.msra.mxu0 0.0
        %1665 = vmatpush.msra.mxu0 0.0
        %1666 = vmatpush.msra.mxu0 0.0
        %1667 = vmatpush.msra.mxu0 0.0
        %1668 = vmatpush.msra.mxu0 0.0
        %1669 = vmatpush.msra.mxu0 0.0
        %1670 = vmatpush.msra.mxu0 %v1615
        %1671 = vmatpush.msra.mxu0 %v1614
        %1672 = vmatpush.msra.mxu0 %v1613
        %1673 = vmatpush.msra.mxu0 %v1612
        %1674 = vmatpush.msra.mxu0 %v1611
        %1675 = vmatpush.msra.mxu0 %v1610
        %1676 = vmatpush.msra.mxu0 %v1609
        %1677 = vmatpush.msra.mxu0 %v1608
        %1678 = vmatmul.f32.gmra.mxu0 %v1657
        %v1679 = vpop.f32.mrf.mxu0
        %v1680 = vadd.f32 %v1651, %v1679
        %1681 = vmatmul.f32.gmra.mxu0 %v1660
        %v1682 = vpop.f32.mrf.mxu0
        %v1683 = vadd.f32 %v1654, %v1682
        %1684 = vdwg.mxu0
        %v1685 = vld [vmem:[#allocation3 + $0x2] sm:$0xff]
        %v1686 = vld [vmem:[#allocation3 + $0xa] sm:$0xff]
        %s1687 = scalar_lea.vmem [#allocation18], 128
        %v1688 = vld [vmem:[%s1687] sm:$0xff]
        %v1689 = vld [vmem:[%s1687 + $0x8] sm:$0xff]
        %v1690 = vld [vmem:[%s1687 + $0x10] sm:$0xff]
        %v1691 = vld [vmem:[%s1687 + $0x18] sm:$0xff]
        %v1692 = vld [vmem:[%s1687 + $0x20] sm:$0xff]
        %v1693 = vld [vmem:[%s1687 + $0x28] sm:$0xff]
        %v1694 = vld [vmem:[%s1687 + $0x30] sm:$0xff]
        %v1695 = vld [vmem:[%s1687 + $0x38] sm:$0xff]
        %v1697 = vsel %vm787, %v1685, 0
        %v1700 = vsel %vm787, %v1686, 0
        %1702 = vmatpush.msra.mxu0 0.0
        %1703 = vmatpush.msra.mxu0 0.0
        %1704 = vmatpush.msra.mxu0 0.0
        %1705 = vmatpush.msra.mxu0 0.0
        %1706 = vmatpush.msra.mxu0 0.0
        %1707 = vmatpush.msra.mxu0 0.0
        %1708 = vmatpush.msra.mxu0 0.0
        %1709 = vmatpush.msra.mxu0 0.0
        %1710 = vmatpush.msra.mxu0 %v1695
        %1711 = vmatpush.msra.mxu0 %v1694
        %1712 = vmatpush.msra.mxu0 %v1693
        %1713 = vmatpush.msra.mxu0 %v1692
        %1714 = vmatpush.msra.mxu0 %v1691
        %1715 = vmatpush.msra.mxu0 %v1690
        %1716 = vmatpush.msra.mxu0 %v1689
        %1717 = vmatpush.msra.mxu0 %v1688
        %1718 = vmatmul.f32.gmra.mxu0 %v1697
        %v1719 = vpop.f32.mrf.mxu0
        %v1720 = vadd.f32 0.0, %v1719
        %1721 = vmatmul.f32.gmra.mxu0 %v1700
        %v1722 = vpop.f32.mrf.mxu0
        %v1723 = vadd.f32 0.0, %v1722
        %1724 = vdwg.mxu0
        %v1725 = vadd.f32 %v1680, %v1720
        %v1726 = vadd.f32 %v1683, %v1723
        %v1727 = vld [vmem:[%s16] sm:$0x1]
        %v1729 = vperm.slane %v1727, 0
        %v1731 = vadd.f32 %v1725, %v1729
        %v1732 = vadd.f32 %v1726, %v1729
        %v1733 = vmax.f32 %v1731, 0.0
        %v1734 = vmax.f32 %v1732, 0.0
        %1735 = vst.msk [vmem:[#allocation2 + $0x1] sm:$0xff] %vm787, %v1733
        %1736 = vst.msk [vmem:[#allocation2 + $0x9] sm:$0xff] %vm787, %v1734
        %v1737 = vld [vmem:[#allocation2] sm:$0xff]
        %v1738 = vld [vmem:[#allocation2 + $0x8] sm:$0xff]
        %v1739 = vld [vmem:[#allocation19] sm:$0xff]
        %v1740 = vld [vmem:[#allocation19 + $0x8] sm:$0xff]
        %v1741 = vld [vmem:[#allocation19 + $0x10] sm:$0xff]
        %v1742 = vld [vmem:[#allocation19 + $0x18] sm:$0xff]
        %v1743 = vld [vmem:[#allocation19 + $0x20] sm:$0xff]
        %v1744 = vld [vmem:[#allocation19 + $0x28] sm:$0xff]
        %v1745 = vld [vmem:[#allocation19 + $0x30] sm:$0xff]
        %v1746 = vld [vmem:[#allocation19 + $0x38] sm:$0xff]
        %v1747 = vld [vmem:[#allocation19 + $0x40] sm:$0xff]
        %v1748 = vld [vmem:[#allocation19 + $0x48] sm:$0xff]
        %v1749 = vld [vmem:[#allocation19 + $0x50] sm:$0xff]
        %v1750 = vld [vmem:[#allocation19 + $0x58] sm:$0xff]
        %v1751 = vld [vmem:[#allocation19 + $0x60] sm:$0xff]
        %v1752 = vld [vmem:[#allocation19 + $0x68] sm:$0xff]
        %v1753 = vld [vmem:[#allocation19 + $0x70] sm:$0xff]
        %v1754 = vld [vmem:[#allocation19 + $0x78] sm:$0xff]
        %v1755 = vld [vmem:[#allocation2 + $0x1] sm:$0xff]
        %v1756 = vld [vmem:[#allocation2 + $0x9] sm:$0xff]
        %s1757 = scalar_lea.vmem [#allocation19], 128
        %v1758 = vld [vmem:[%s1757] sm:$0xff]
        %v1759 = vld [vmem:[%s1757 + $0x8] sm:$0xff]
        %v1760 = vld [vmem:[%s1757 + $0x10] sm:$0xff]
        %v1761 = vld [vmem:[%s1757 + $0x18] sm:$0xff]
        %v1762 = vld [vmem:[%s1757 + $0x20] sm:$0xff]
        %v1763 = vld [vmem:[%s1757 + $0x28] sm:$0xff]
        %v1764 = vld [vmem:[%s1757 + $0x30] sm:$0xff]
        %v1765 = vld [vmem:[%s1757 + $0x38] sm:$0xff]
        %v1766 = vld [vmem:[%s1757 + $0x40] sm:$0xff]
        %v1767 = vld [vmem:[%s1757 + $0x48] sm:$0xff]
        %v1768 = vld [vmem:[%s1757 + $0x50] sm:$0xff]
        %v1769 = vld [vmem:[%s1757 + $0x58] sm:$0xff]
        %v1770 = vld [vmem:[%s1757 + $0x60] sm:$0xff]
        %v1771 = vld [vmem:[%s1757 + $0x68] sm:$0xff]
        %v1772 = vld [vmem:[%s1757 + $0x70] sm:$0xff]
        %v1773 = vld [vmem:[%s1757 + $0x78] sm:$0xff]
        %v1775 = vsel %vm787, %v1755, 0
        %v1778 = vsel %vm787, %v1756, 0
        %1780 = vmatpush.msra.mxu0 0.0
        %1781 = vmatpush.msra.mxu0 0.0
        %1782 = vmatpush.msra.mxu0 0.0
        %1783 = vmatpush.msra.mxu0 0.0
        %1784 = vmatpush.msra.mxu0 0.0
        %1785 = vmatpush.msra.mxu0 0.0
        %1786 = vmatpush.msra.mxu0 0.0
        %1787 = vmatpush.msra.mxu0 0.0
        %1788 = vmatpush.msra.mxu0 %v1772
        %1789 = vmatpush.msra.mxu0 %v1770
        %1790 = vmatpush.msra.mxu0 %v1768
        %1791 = vmatpush.msra.mxu0 %v1766
        %1792 = vmatpush.msra.mxu0 %v1764
        %1793 = vmatpush.msra.mxu0 %v1762
        %1794 = vmatpush.msra.mxu0 %v1760
        %1795 = vmatpush.msra.mxu0 %v1758
        %1796 = vmatmul.f32.gmra.mxu0 %v1775
        %v1797 = vpop.f32.mrf.mxu0
        %v1798 = vadd.f32 0.0, %v1797
        %1799 = vmatmul.f32.gmra.mxu0 %v1778
        %v1800 = vpop.f32.mrf.mxu0
        %v1801 = vadd.f32 0.0, %v1800
        %1802 = vdwg.mxu0
        %1803 = vmatpush.msra.mxu0 0.0
        %1804 = vmatpush.msra.mxu0 0.0
        %1805 = vmatpush.msra.mxu0 0.0
        %1806 = vmatpush.msra.mxu0 0.0
        %1807 = vmatpush.msra.mxu0 0.0
        %1808 = vmatpush.msra.mxu0 0.0
        %1809 = vmatpush.msra.mxu0 0.0
        %1810 = vmatpush.msra.mxu0 0.0
        %1811 = vmatpush.msra.mxu0 %v1773
        %1812 = vmatpush.msra.mxu0 %v1771
        %1813 = vmatpush.msra.mxu0 %v1769
        %1814 = vmatpush.msra.mxu0 %v1767
        %1815 = vmatpush.msra.mxu0 %v1765
        %1816 = vmatpush.msra.mxu0 %v1763
        %1817 = vmatpush.msra.mxu0 %v1761
        %1818 = vmatpush.msra.mxu0 %v1759
        %1819 = vmatmul.f32.gmra.mxu0 %v1775
        %v1820 = vpop.f32.mrf.mxu0
        %v1821 = vadd.f32 0.0, %v1820
        %1822 = vmatmul.f32.gmra.mxu0 %v1778
        %v1823 = vpop.f32.mrf.mxu0
        %v1824 = vadd.f32 0.0, %v1823
        %1825 = vdwg.mxu0
        %v1827 = vsel %vm787, %v1737, 0
        %v1830 = vsel %vm787, %v1738, 0
        %1832 = vmatpush.msra.mxu0 0.0
        %1833 = vmatpush.msra.mxu0 0.0
        %1834 = vmatpush.msra.mxu0 0.0
        %1835 = vmatpush.msra.mxu0 0.0
        %1836 = vmatpush.msra.mxu0 0.0
        %1837 = vmatpush.msra.mxu0 0.0
        %1838 = vmatpush.msra.mxu0 0.0
        %1839 = vmatpush.msra.mxu0 0.0
        %1840 = vmatpush.msra.mxu0 %v1753
        %1841 = vmatpush.msra.mxu0 %v1751
        %1842 = vmatpush.msra.mxu0 %v1749
        %1843 = vmatpush.msra.mxu0 %v1747
        %1844 = vmatpush.msra.mxu0 %v1745
        %1845 = vmatpush.msra.mxu0 %v1743
        %1846 = vmatpush.msra.mxu0 %v1741
        %1847 = vmatpush.msra.mxu0 %v1739
        %1848 = vmatmul.f32.gmra.mxu0 %v1827
        %v1849 = vpop.f32.mrf.mxu0
        %v1850 = vadd.f32 %v1798, %v1849
        %1851 = vmatmul.f32.gmra.mxu0 %v1830
        %v1852 = vpop.f32.mrf.mxu0
        %v1853 = vadd.f32 %v1801, %v1852
        %1854 = vdwg.mxu0
        %1855 = vmatpush.msra.mxu0 0.0
        %1856 = vmatpush.msra.mxu0 0.0
        %1857 = vmatpush.msra.mxu0 0.0
        %1858 = vmatpush.msra.mxu0 0.0
        %1859 = vmatpush.msra.mxu0 0.0
        %1860 = vmatpush.msra.mxu0 0.0
        %1861 = vmatpush.msra.mxu0 0.0
        %1862 = vmatpush.msra.mxu0 0.0
        %1863 = vmatpush.msra.mxu0 %v1754
        %1864 = vmatpush.msra.mxu0 %v1752
        %1865 = vmatpush.msra.mxu0 %v1750
        %1866 = vmatpush.msra.mxu0 %v1748
        %1867 = vmatpush.msra.mxu0 %v1746
        %1868 = vmatpush.msra.mxu0 %v1744
        %1869 = vmatpush.msra.mxu0 %v1742
        %1870 = vmatpush.msra.mxu0 %v1740
        %1871 = vmatmul.f32.gmra.mxu0 %v1827
        %v1872 = vpop.f32.mrf.mxu0
        %v1873 = vadd.f32 %v1821, %v1872
        %1874 = vmatmul.f32.gmra.mxu0 %v1830
        %v1875 = vpop.f32.mrf.mxu0
        %v1876 = vadd.f32 %v1824, %v1875
        %1877 = vdwg.mxu0
        %v1878 = vld [vmem:[#allocation2 + $0x2] sm:$0xff]
        %v1879 = vld [vmem:[#allocation2 + $0xa] sm:$0xff]
        %s1880 = scalar_lea.vmem [#allocation19], 256
        %v1881 = vld [vmem:[%s1880] sm:$0xff]
        %v1882 = vld [vmem:[%s1880 + $0x8] sm:$0xff]
        %v1883 = vld [vmem:[%s1880 + $0x10] sm:$0xff]
        %v1884 = vld [vmem:[%s1880 + $0x18] sm:$0xff]
        %v1885 = vld [vmem:[%s1880 + $0x20] sm:$0xff]
        %v1886 = vld [vmem:[%s1880 + $0x28] sm:$0xff]
        %v1887 = vld [vmem:[%s1880 + $0x30] sm:$0xff]
        %v1888 = vld [vmem:[%s1880 + $0x38] sm:$0xff]
        %v1889 = vld [vmem:[%s1880 + $0x40] sm:$0xff]
        %v1890 = vld [vmem:[%s1880 + $0x48] sm:$0xff]
        %v1891 = vld [vmem:[%s1880 + $0x50] sm:$0xff]
        %v1892 = vld [vmem:[%s1880 + $0x58] sm:$0xff]
        %v1893 = vld [vmem:[%s1880 + $0x60] sm:$0xff]
        %v1894 = vld [vmem:[%s1880 + $0x68] sm:$0xff]
        %v1895 = vld [vmem:[%s1880 + $0x70] sm:$0xff]
        %v1896 = vld [vmem:[%s1880 + $0x78] sm:$0xff]
        %v1898 = vsel %vm787, %v1878, 0
        %v1901 = vsel %vm787, %v1879, 0
        %1903 = vmatpush.msra.mxu0 0.0
        %1904 = vmatpush.msra.mxu0 0.0
        %1905 = vmatpush.msra.mxu0 0.0
        %1906 = vmatpush.msra.mxu0 0.0
        %1907 = vmatpush.msra.mxu0 0.0
        %1908 = vmatpush.msra.mxu0 0.0
        %1909 = vmatpush.msra.mxu0 0.0
        %1910 = vmatpush.msra.mxu0 0.0
        %1911 = vmatpush.msra.mxu0 %v1895
        %1912 = vmatpush.msra.mxu0 %v1893
        %1913 = vmatpush.msra.mxu0 %v1891
        %1914 = vmatpush.msra.mxu0 %v1889
        %1915 = vmatpush.msra.mxu0 %v1887
        %1916 = vmatpush.msra.mxu0 %v1885
        %1917 = vmatpush.msra.mxu0 %v1883
        %1918 = vmatpush.msra.mxu0 %v1881
        %1919 = vmatmul.f32.gmra.mxu0 %v1898
        %v1920 = vpop.f32.mrf.mxu0
        %v1921 = vadd.f32 0.0, %v1920
        %1922 = vmatmul.f32.gmra.mxu0 %v1901
        %v1923 = vpop.f32.mrf.mxu0
        %v1924 = vadd.f32 0.0, %v1923
        %1925 = vdwg.mxu0
        %1926 = vmatpush.msra.mxu0 0.0
        %1927 = vmatpush.msra.mxu0 0.0
        %1928 = vmatpush.msra.mxu0 0.0
        %1929 = vmatpush.msra.mxu0 0.0
        %1930 = vmatpush.msra.mxu0 0.0
        %1931 = vmatpush.msra.mxu0 0.0
        %1932 = vmatpush.msra.mxu0 0.0
        %1933 = vmatpush.msra.mxu0 0.0
        %1934 = vmatpush.msra.mxu0 %v1896
        %1935 = vmatpush.msra.mxu0 %v1894
        %1936 = vmatpush.msra.mxu0 %v1892
        %1937 = vmatpush.msra.mxu0 %v1890
        %1938 = vmatpush.msra.mxu0 %v1888
        %1939 = vmatpush.msra.mxu0 %v1886
        %1940 = vmatpush.msra.mxu0 %v1884
        %1941 = vmatpush.msra.mxu0 %v1882
        %1942 = vmatmul.f32.gmra.mxu0 %v1898
        %v1943 = vpop.f32.mrf.mxu0
        %v1944 = vadd.f32 0.0, %v1943
        %1945 = vmatmul.f32.gmra.mxu0 %v1901
        %v1946 = vpop.f32.mrf.mxu0
        %v1947 = vadd.f32 0.0, %v1946
        %1948 = vdwg.mxu0
        %v1949 = vadd.f32 %v1850, %v1921
        %v1950 = vadd.f32 %v1873, %v1944
        %v1951 = vadd.f32 %v1853, %v1924
        %v1952 = vadd.f32 %v1876, %v1947
        %v1953 = vld [vmem:[%s18] sm:$0x3]
        %v1955 = vperm.slane %v1953, 0
        %v1956 = vperm.slane %v1953, 1
        %v1959 = vadd.f32 %v1949, %v1955
        %v1960 = vadd.f32 %v1950, %v1956
        %v1961 = vadd.f32 %v1951, %v1955
        %v1962 = vadd.f32 %v1952, %v1956
        %v1963 = vmax.f32 %v1959, 0.0
        %v1964 = vmax.f32 %v1960, 0.0
        %v1965 = vmax.f32 %v1961, 0.0
        %v1966 = vmax.f32 %v1962, 0.0
        %v1967 = vmul.f32 %v1963, 0.0625
        %v1968 = vmul.f32 %v1964, 0.0625
        %v1969 = vmul.f32 %v1965, 0.0625
        %v1970 = vmul.f32 %v1966, 0.0625
        %v1971 = vadd.f32 %v1385, %v1967
        %v1972 = vadd.f32 %v1386, %v1968
        %v1973 = vadd.f32 %v1387, %v1969
        %v1974 = vadd.f32 %v1388, %v1970
        %1975 = vst [vmem:[%s767] sm:$0xff] %v1971
        %1976 = vst [vmem:[%s767 + $0x8] sm:$0xff] %v1972
        %1977 = vst [vmem:[%s767 + $0x10] sm:$0xff] %v1973
        %1978 = vst [vmem:[%s767 + $0x18] sm:$0xff] %v1974
        %s1979 = sand.u32 %s453, 1
        %s1980 = scalar_lea.sflag [#allocation6], %s1979
        %s1981 = sand.u32 %s453, 1
        %s1982 = smul.addr %s1981, 32
        %s1983 = scalar_lea.vmem [#allocation21], %s1982
        // Predicated region
        $region137: #{tpu_custom_call.1} parent=95 // pred_check
          %p1984 = pneg %p463
        $region138: #{tpu_custom_call.1} parent=95 // pred_check_branch
          %1986 = sbr.rel (%p1984) target = $region140
        $region139: #{tpu_custom_call.1} parent=95 // pred_region
          %1988 = vsyncadd %s1980, 0
          %s1989 = smul.addr %s41, 4
          %s1990 = smul.addr %s1989, 8
          %s1991 = scalar_lea.hbm %s19, %s1990
          %s1992 = sshll.u32 %s1983, 4
          %s1993 = int_to_ptr.vmem [resolvable:$true] %s1992
          %s1994 = sshll.u32 %s1991, 4
          %s1995 = int_to_ptr.hbm [resolvable:$true] %s1994
          %2000 = dma.vmem_to_hbm [thread:$0]  %s1993, 512, %s1995, %s1980, 256, 256, 16
        $region140: #{tpu_custom_call.1} parent=95 // pred_fallthru
          _
      $region96: #{tpu_custom_call.1} parent=5 // pred_fallthru
        _
      %p2001 = scmp.le.s32.totalorder 2, %s36
      // Predicated region
      $region141: #{tpu_custom_call.1} parent=5 // pred_check
        %p2002 = pneg %p2001
      $region142: #{tpu_custom_call.1} parent=5 // pred_check_branch
        %2004 = sbr.rel (%p2002) target = $region144
      $region143: #{tpu_custom_call.1} parent=5 // pred_region
        %s2005 = ssub.s32 %s36, 2
        // Predicated region
        $region145: #{tpu_custom_call.1} parent=143 // pred_check
          %p2006 = pneg %p469
        $region146: #{tpu_custom_call.1} parent=143 // pred_check_branch
          %2008 = sbr.rel (%p2006) target = $region148
        $region147: #{tpu_custom_call.1} parent=143 // pred_region
          %s2009 = sand.u32 %s454, 1
          %s2010 = scalar_lea.sflag [#allocation6], %s2009
          %s2011 = sand.u32 %s454, 1
          %s2012 = smul.addr %s2011, 32
          %s2013 = scalar_lea.vmem [#allocation21], %s2012
          %2015 = dma.done %s2010, 512
        $region148: #{tpu_custom_call.1} parent=143 // pred_fallthru
          _
      $region144: #{tpu_custom_call.1} parent=5 // pred_fallthru
        _
    $region6: #{tpu_custom_call.1} parent=1 // loop_footer
      %s40 = sadd.s32 1, %s36
    $region7: #{tpu_custom_call.1} parent=1 // loop_footer_branch
      %35 = sbr.rel target = $region3
    $region8: #{tpu_custom_call.1} parent=1 // loop_exit
      _
    %2016 = vsyncpa [#allocation5], 1
    %s2017 = scalar_lea.sflag [#allocation5], 1
    %2018 = vsyncpa %s2017, 1
    %2019 = vsyncpa [#allocation8], 1
    %2020 = vsyncpa [#allocation11], 1
    %2021 = vsyncpa [#allocation14], 1
    %2022 = vsyncpa [#allocation17], 1
    %2023 = vsyncpa [#allocation20], 1
    %2024 = vsyncpa [#allocation6], 1
    %s2025 = scalar_lea.sflag [#allocation6], 1
    %2026 = vsyncpa %s2025, 1

</llo_original>
